<compile_context>
chip_gen: v7x
topology: tpu7x:2x2x1
jax: 0.10.0
libtpu: 0.0.40
codegen_flags: <defaults>
</compile_context>

<pallas_src>
import functools
import numpy as np
import jax
import jax.numpy as jnp
from jax.experimental import pallas as pl
from jax.experimental.pallas import tpu as pltpu

TOP_K = 2          # == self.expert_capacity in the PyTorch module
LANES = 128

_SQRT_2_OVER_PI = 0.7978845608028654


def _gelu_tanh(x):
    # tanh-form GELU (EUP transcendental, ~1e-3 abs err vs erf GELU).
    # TODO(synk): exact erf GELU if Mosaic grows an erf lowering.
    return 0.5 * x * (1.0 + jnp.tanh(_SQRT_2_OVER_PI * (x + 0.044715 * (x * x * x))))


def _round_up(a, b):
    return (a + b - 1) // b * b


# --------------------------------- kernel ------------------------------------

def _moe_kernel(x_ref, gw_ref, gb_ref,
                w1_ref, b1_ref, w2_ref, b2_ref, w3_ref, b3_ref,
                out_ref, counts_ref,
                w_sc, xbf_sc, acc_sc, *, n_valid, num_experts):
    i = pl.program_id(0)            # token tile
    e = pl.program_id(1)            # expert
    f = pl.program_id(2)            # F chunk
    nf = pl.num_programs(2)
    tt = x_ref.shape[0]
    e_pad = gw_ref.shape[1]         # lane-padded expert axis (>= 128)

    # -------- once per token tile: router + tile init (first (e, f) step) --------
    @pl.when((e == 0) & (f == 0))
    def _router():
        x32 = x_ref[...].astype(jnp.float32)
        xbf_sc[...] = x32.astype(xbf_sc.dtype)       # hoisted cast, reused E*nf times
        acc_sc[...] = jnp.zeros_like(acc_sc)

        # f32 router.  Padded expert lanes have zero weight columns and -1e30
        # bias, so their softmax prob is exactly 0 and they are never selected.
        logits = jnp.dot(x32, gw_ref[...], preferred_element_type=jnp.float32) + gb_ref[...]
        logits = logits - jnp.max(logits, axis=-1, keepdims=True)
        ex = jnp.exp(logits)
        probs = ex / jnp.sum(ex, axis=-1, keepdims=True)                  # (tt, e_pad)

        # vectorized top-2 with lowest-index tie-break (matches torch.topk).
        col = jax.lax.broadcasted_iota(jnp.int32, probs.shape, 1)
        m1 = jnp.max(probs, axis=-1, keepdims=True)
        i1 = jnp.min(jnp.where(probs == m1, col, e_pad), axis=-1, keepdims=True)
        sel1 = col == i1
        probs_m = jnp.where(sel1, -jnp.inf, probs)
        m2 = jnp.max(probs_m, axis=-1, keepdims=True)
        i2 = jnp.min(jnp.where(probs_m == m2, col, e_pad), axis=-1, keepdims=True)
        sel = (sel1 | (col == i2)).astype(jnp.float32)                    # (tt, e_pad)

        # mask padded token rows so they neither route nor count
        row = i * tt + jax.lax.broadcasted_iota(jnp.int32, (tt, 1), 0)
        sel = sel * (row < n_valid).astype(jnp.float32)

        sel_p = probs * sel
        denom = jnp.maximum(jnp.sum(sel_p, axis=-1, keepdims=True), 1e-30)
        w = sel_p / denom                                                 # renormalized top-2

        # Store per-expert routing weights in (E, tt, 1) layout so expert steps
        # read them with a free first-axis index.
        # TODO(synk): for large E replace this static unroll with one transpose.
        for ee in range(num_experts):
            w_sc[ee] = jnp.sum(w * (col == ee).astype(jnp.float32), axis=-1, keepdims=True)

        # lane-dense per-tile expert counts (padded lanes are zero).
        cnt = jnp.sum(sel, axis=0, keepdims=True)                         # (1, e_pad)
        counts_ref[0] = jnp.broadcast_to(cnt, counts_ref.shape[1:])

    # -------- expert e, F-chunk f: GEGLU partials on the MXU (bf16 in, f32 acc) --------
    xc = xbf_sc[...]                                                      # (tt, H) bf16
    h = jnp.dot(xc, w1_ref[0], preferred_element_type=jnp.float32) + b1_ref[0]    # (tt, tf)
    up = jnp.dot(xc, w2_ref[0], preferred_element_type=jnp.float32) + b2_ref[0]   # (tt, tf)
    inter = (_gelu_tanh(h) * up).astype(w3_ref.dtype)
    down = jnp.dot(inter, w3_ref[0], preferred_element_type=jnp.float32)          # (tt, H)

    w_e = w_sc[e]                                                         # (tt, 1), direct read
    acc_sc[...] += w_e * down

    @pl.when(f == 0)
    def _bias3():
        acc_sc[...] += w_e * b3_ref[0]                                    # bias once per expert

    @pl.when((e == pl.num_programs(1) - 1) & (f == nf - 1))
    def _finalize():
        out_ref[...] = acc_sc[...].astype(out_ref.dtype)


# -------------------------------- packing -------------------------------------

def pack_moe_params(params, compute_dtype=jnp.bfloat16):
    """One-time weight prep (NOT per step): (in, out) layout, bf16 experts,
    lane-padded (to 128) router so the router path / counts output are lane-dense."""
    E, F = params["b1"].shape
    H = params["gate_w"].shape[1]
    e_pad = _round_up(max(E, LANES), LANES)
    gw = jnp.zeros((H, e_pad), jnp.float32).at[:, :E].set(params["gate_w"].T.astype(jnp.float32))
    gb = jnp.full((1, e_pad), -1e30, jnp.float32).at[0, :E].set(params["gate_b"].astype(jnp.float32))
    return {
        "gw": gw,                                                             # (H, e_pad) f32
        "gb": gb,                                                             # (1, e_pad) f32
        "w1": jnp.transpose(params["w1"], (0, 2, 1)).astype(compute_dtype),   # (E, H, F)
        "b1": params["b1"].reshape(E, 1, F).astype(jnp.float32),
        "w2": jnp.transpose(params["w2"], (0, 2, 1)).astype(compute_dtype),   # (E, H, F)
        "b2": params["b2"].reshape(E, 1, F).astype(jnp.float32),
        "w3": jnp.transpose(params["w3"], (0, 2, 1)).astype(compute_dtype),   # (E, F, H)
        "b3": params["b3"].reshape(E, 1, H).astype(jnp.float32),
    }


# ---------------------------- tile / VMEM sizing -------------------------------

def _vmem_budget_bytes():
    try:
        info = pltpu.get_tpu_info()
        cap = getattr(info, "vmem_capacity_bytes", None)
        if cap:
            return int(cap) * 3 // 4        # leave headroom for the compiler
    except Exception:
        pass
    return 48 * 1024 * 1024                 # safe floor (v7x: 64 MiB physical per TC)


def _estimate_vmem_bytes(tt, tf, H, E, e_pad, out_bytes):
    db = 2  # BlockSpec double-buffering
    blocks = (tt * H * 4                    # x tile (f32)
              + H * e_pad * 4 + e_pad * 4   # gate w / b
              + 2 * H * tf * 2              # W1 + W2 chunk (bf16)
              + tf * H * 2                  # W3 chunk (bf16)
              + 2 * tf * 4 + H * 4          # b1, b2 chunk + b3
              + tt * H * out_bytes          # output tile
              + 8 * e_pad * 4) * db         # counts block
    scratch = E * tt * LANES * 4 + tt * H * 2 + tt * H * 4   # w_sc (lane-padded) + x_bf16 + acc
    live = 3 * tt * tf * 4                                   # h / up / inter f32 intermediates
    return blocks + scratch + live


def _pick_tiles(T, H, F, E, e_pad, out_bytes, token_tile, budget):
    est = lambda a, b: _estimate_vmem_bytes(a, b, H, E, e_pad, out_bytes)
    tt = max(8, min(_round_up(token_tile, 8), _round_up(T, 8)))
    # v7x megacore: make sure the "parallel" token axis has >= 2 tiles to shard across TCs.
    if _round_up(T, tt) // tt < 2 and T > 8:
        tt = max(8, _round_up(pl.cdiv(T, 2), 8))
    # F chunk: largest 128-multiple dividing F that fits the budget (256-multiples
    # preferred implicitly for v6e/v7x MXU since we search from the top), else full F.
    if F % 128 == 0:
        cands = [c for c in range(min(F, 2048), 127, -128) if F % c == 0]
    else:
        cands = [F]
    tf = cands[-1]
    for c in cands:
        if est(tt, c) <= budget:
            tf = c
            break
    # grow the token tile to amortize expert-weight re-streaming, keeping >= 2 tiles
    while (tt < 2048 and tt * 2 <= _round_up(T, 8)
           and _round_up(T, tt * 2) // (tt * 2) >= 2
           and est(tt * 2, tf) <= budget):
        tt *= 2
    # last resort: shrink the token tile if still over budget
    while est(tt, tf) > budget and tt > 8:
        tt = max(8, _round_up(tt // 2, 8))
    return tt, tf


# -------------------------------- wrapper -------------------------------------

def moe_feed_forward(x, packed, *, token_tile=256):
    """x: (..., H). packed: output of pack_moe_params. Returns (out, balance_loss)."""
    orig_shape = x.shape
    H = x.shape[-1]
    xf = x.reshape(-1, H)
    T = xf.shape[0]
    E, _, F = packed["w1"].shape
    e_pad = packed["gw"].shape[1]
    out_bytes = jnp.dtype(x.dtype).itemsize

    budget = _vmem_budget_bytes()
    tt, tf = _pick_tiles(T, H, F, E, e_pad, out_bytes, token_tile, budget)
    T_pad = _round_up(T, tt)
    if T_pad != T:
        xf = jnp.pad(xf, ((0, T_pad - T), (0, 0)))
    num_tiles = T_pad // tt
    num_f = F // tf

    vmem_limit = int(min(budget,
                         max(2 * _estimate_vmem_bytes(tt, tf, H, E, e_pad, out_bytes),
                             32 * 1024 * 1024)))

    kernel = functools.partial(_moe_kernel, n_valid=T, num_experts=E)

    out, counts = pl.pallas_call(
        kernel,
        out_shape=(jax.ShapeDtypeStruct((T_pad, H), x.dtype),
                   jax.ShapeDtypeStruct((num_tiles, 8, e_pad), jnp.float32)),
        grid_spec=pltpu.PrefetchScalarGridSpec(
            num_scalar_prefetch=0,
            grid=(num_tiles, E, num_f),
            in_specs=[
                pl.BlockSpec((tt, H), lambda i, e, f: (i, 0)),          # x tile (resident)
                pl.BlockSpec((H, e_pad), lambda i, e, f: (0, 0)),       # gate W (resident)
                pl.BlockSpec((1, e_pad), lambda i, e, f: (0, 0)),       # gate b
                pl.BlockSpec((1, H, tf), lambda i, e, f: (e, 0, f)),    # W1[e, :, f-chunk]
                pl.BlockSpec((1, 1, tf), lambda i, e, f: (e, 0, f)),    # b1[e, f-chunk]
                pl.BlockSpec((1, H, tf), lambda i, e, f: (e, 0, f)),    # W2[e, :, f-chunk]
                pl.BlockSpec((1, 1, tf), lambda i, e, f: (e, 0, f)),    # b2[e, f-chunk]
                pl.BlockSpec((1, tf, H), lambda i, e, f: (e, f, 0)),    # W3[e, f-chunk, :]
                pl.BlockSpec((1, 1, H), lambda i, e, f: (e, 0, 0)),     # b3[e]
            ],
            out_specs=[
                pl.BlockSpec((tt, H), lambda i, e, f: (i, 0)),          # output tile
                pl.BlockSpec((1, 8, e_pad), lambda i, e, f: (i, 0, 0)),  # lane-dense counts
            ],
            scratch_shapes=[
                pltpu.VMEM((E, tt, 1), jnp.float32),                    # routing weights (E, tt, 1)
                pltpu.VMEM((tt, H), packed["w1"].dtype),                # hoisted bf16 x
                pltpu.VMEM((tt, H), jnp.float32),                       # expert-sum accumulator
            ],
        ),
        compiler_params=pltpu.CompilerParams(
            dimension_semantics=("parallel", "arbitrary", "arbitrary"),
            vmem_limit_bytes=vmem_limit),
    )(xf, packed["gw"], packed["gb"],
      packed["w1"], packed["b1"], packed["w2"], packed["b2"],
      packed["w3"], packed["b3"])

    counts_per_expert = jnp.sum(counts[:, 0, :E], axis=0)              # (E,)
    utilization = counts_per_expert / float(T)
    balance_loss = jnp.sum((utilization - 1.0 / E) ** 2)
    out = out[:T].reshape(orig_shape)
    # TODO(synk): training-mode dropout not implemented; p=0 / eval => identity.
    return out, balance_loss


# ------------------------- pure-JAX reference (exact) -------------------------

def moe_reference(x, params):
    H = x.shape[-1]
    xf = x.reshape(-1, H).astype(jnp.float32)
    E = params["gate_w"].shape[0]
    logits = xf @ params["gate_w"].T + params["gate_b"]
    probs = jax.nn.softmax(logits, axis=-1)
    topw, topi = jax.lax.top_k(probs, TOP_K)
    topw = topw / topw.sum(-1, keepdims=True)
    out = jnp.zeros_like(xf)
    util = []
    for e in range(E):
        selected = (topi == e)
        mask = selected.any(-1)
        w = jnp.where(selected, topw, 0.0).sum(-1)
        h = xf @ params["w1"][e].T + params["b1"][e]
        gate = 0.5 * h * (1.0 + jax.lax.erf(h / jnp.sqrt(2.0)))
        up = xf @ params["w2"][e].T + params["b2"][e]
        down = (gate * up) @ params["w3"][e].T + params["b3"][e]
        out = out + (mask.astype(xf.dtype) * w)[:, None] * down
        util.append(mask.astype(jnp.float32).mean())
    util = jnp.stack(util)
    loss = jnp.sum((util - 1.0 / E) ** 2)
    return out.reshape(x.shape), loss


# ---------------------------------- main --------------------------------------

if __name__ == "__main__":
    # config (matches the PyTorch module's __init__ shapes)
    hidden_size = 32
    feed_forward_dim = 64
    num_experts = 2
    batch, seq = 2, 8

    key = jax.random.PRNGKey(0)
    keys = jax.random.split(key, 10)
    scale = 0.05
    params = {
        # PyTorch Linear convention: weight is (out_features, in_features)
        "gate_w": scale * jax.random.normal(keys[0], (num_experts, hidden_size), jnp.float32),
        "gate_b": scale * jax.random.normal(keys[1], (num_experts,), jnp.float32),
        "w1": scale * jax.random.normal(keys[2], (num_experts, feed_forward_dim, hidden_size), jnp.float32),
        "b1": scale * jax.random.normal(keys[3], (num_experts, feed_forward_dim), jnp.float32),
        "w2": scale * jax.random.normal(keys[4], (num_experts, feed_forward_dim, hidden_size), jnp.float32),
        "b2": scale * jax.random.normal(keys[5], (num_experts, feed_forward_dim), jnp.float32),
        "w3": scale * jax.random.normal(keys[6], (num_experts, hidden_size, feed_forward_dim), jnp.float32),
        "b3": scale * jax.random.normal(keys[7], (num_experts, hidden_size), jnp.float32),
    }
    x = jax.random.normal(keys[8], (batch, seq, hidden_size), jnp.float32)

    packed = pack_moe_params(params)          # one-time weight prep (hoisted out of hot path)
    out, balance_loss = moe_feed_forward(x, packed, token_tile=256)
    out = jax.block_until_ready(out)
    balance_loss = jax.block_until_ready(balance_loss)

    ref_out, ref_loss = moe_reference(x, params)
    np.testing.assert_allclose(np.asarray(out), np.asarray(ref_out), rtol=5e-2, atol=5e-3)
    np.testing.assert_allclose(float(balance_loss), float(ref_loss), atol=1e-6)

    print("KERNEL_OK")
</pallas_src>

<mosaic_0001>
module attributes {stable_mosaic.version = 11 : i64} {
  func.func @_moe_kernel(%arg0: i32, %arg1: i32, %arg2: i32, %arg3: memref<8x32xf32, #tpu.memory_space<vmem>>, %arg4: memref<32x128xf32, #tpu.memory_space<vmem>>, %arg5: memref<1x128xf32, #tpu.memory_space<vmem>>, %arg6: memref<1x32x64xbf16, #tpu.memory_space<vmem>>, %arg7: memref<1x1x64xf32, #tpu.memory_space<vmem>>, %arg8: memref<1x32x64xbf16, #tpu.memory_space<vmem>>, %arg9: memref<1x1x64xf32, #tpu.memory_space<vmem>>, %arg10: memref<1x64x32xbf16, #tpu.memory_space<vmem>>, %arg11: memref<1x1x32xf32, #tpu.memory_space<vmem>>, %arg12: memref<8x32xf32, #tpu.memory_space<vmem>>, %arg13: memref<1x8x128xf32, #tpu.memory_space<vmem>>, %arg14: memref<2x8x1xf32, #tpu.memory_space<vmem>>, %arg15: memref<8x32xbf16, #tpu.memory_space<vmem>>, %arg16: memref<8x32xf32, #tpu.memory_space<vmem>>) attributes {dimension_semantics = [#tpu.dimension_semantics<parallel>, #tpu.dimension_semantics<arbitrary>, #tpu.dimension_semantics<arbitrary>], iteration_bounds = array<i64: 2, 2, 1>, scalar_prefetch = 0 : i64, scratch_operands = 3 : i64, tpu.core_type = #tpu.core_type<tc>, window_params = [{transform_indices = @transform_0, window_bounds = array<i64: 8, 32>}, {pipeline_mode = #tpu.pipeline_mode<synchronous>, transform_indices = @transform_1, window_bounds = array<i64: 32, 128>}, {pipeline_mode = #tpu.pipeline_mode<synchronous>, transform_indices = @transform_2, window_bounds = array<i64: 1, 128>}, {transform_indices = @transform_3, window_bounds = array<i64: 1, 32, 64>}, {transform_indices = @transform_4, window_bounds = array<i64: 1, 1, 64>}, {transform_indices = @transform_5, window_bounds = array<i64: 1, 32, 64>}, {transform_indices = @transform_6, window_bounds = array<i64: 1, 1, 64>}, {transform_indices = @transform_7, window_bounds = array<i64: 1, 64, 32>}, {transform_indices = @transform_8, window_bounds = array<i64: 1, 1, 32>}, {transform_indices = @transform_9, window_bounds = array<i64: 8, 32>}, {transform_indices = @transform_10, window_bounds = array<i64: 1, 8, 128>}]} {
    %c0_i32 = arith.constant 0 : i32
    %0 = arith.cmpi eq, %arg1, %c0_i32 : i32
    %c0_i32_0 = arith.constant 0 : i32
    %1 = arith.cmpi eq, %arg2, %c0_i32_0 : i32
    %2 = arith.andi %0, %1 : i1
    %3 = arith.extui %2 : i1 to i32
    %c0_i32_1 = arith.constant 0 : i32
    %4 = arith.cmpi ne, %3, %c0_i32_1 : i32
    scf.if %4 {
      %c0_34 = arith.constant 0 : index
      %c0_35 = arith.constant 0 : index
      %54 = vector.load %arg3[%c0_34, %c0_35] : memref<8x32xf32, #tpu.memory_space<vmem>>, vector<8x32xf32>
      %55 = arith.truncf %54 : vector<8x32xf32> to vector<8x32xbf16>
      %c0_36 = arith.constant 0 : index
      %c0_37 = arith.constant 0 : index
      %56 = vector.load %arg15[%c0_36, %c0_37] : memref<8x32xbf16, #tpu.memory_space<vmem>>, vector<8x32xbf16>
      tpu.vector_store %arg15[%c0_36, %c0_37], %55 {strides = array<i32>} : memref<8x32xbf16, #tpu.memory_space<vmem>>, vector<8x32xbf16>,
      %cst_38 = arith.constant 0.000000e+00 : f32
      %57 = vector.broadcast %cst_38 : f32 to vector<8x32xf32>
      %c0_39 = arith.constant 0 : index
      %c0_40 = arith.constant 0 : index
      %58 = vector.load %arg16[%c0_39, %c0_40] : memref<8x32xf32, #tpu.memory_space<vmem>>, vector<8x32xf32>
      tpu.vector_store %arg16[%c0_39, %c0_40], %57 {strides = array<i32>} : memref<8x32xf32, #tpu.memory_space<vmem>>, vector<8x32xf32>,
      %c0_41 = arith.constant 0 : index
      %c0_42 = arith.constant 0 : index
      %59 = vector.load %arg4[%c0_41, %c0_42] : memref<32x128xf32, #tpu.memory_space<vmem>>, vector<32x128xf32>
      %cst_43 = arith.constant dense<0.000000e+00> : vector<8x128xf32>
      %60 = tpu.matmul %54, %59, %cst_43 {dimension_numbers = #tpu.dot_dimension_numbers<[1], [0], [0], [1], [0, 0, 1, 1], [], []>} : vector<8x32xf32>, vector<32x128xf32>, vector<8x128xf32> -> vector<8x128xf32>
      %c0_44 = arith.constant 0 : index
      %c0_45 = arith.constant 0 : index
      %61 = vector.load %arg5[%c0_44, %c0_45] : memref<1x128xf32, #tpu.memory_space<vmem>>, vector<1x128xf32>
      %62 = vector.broadcast %61 : vector<1x128xf32> to vector<8x128xf32>
      %63 = arith.addf %60, %62 : vector<8x128xf32>
      %cst_46 = arith.constant dense<0xFF800000> : vector<8xf32>
      %64 = vector.multi_reduction <maximumf>, %63, %cst_46 [1] : vector<8x128xf32> to vector<8xf32>
      %65 = vector.shape_cast %64 : vector<8xf32> to vector<8x1xf32>
      %66 = vector.broadcast %65 : vector<8x1xf32> to vector<8x128xf32>
      %67 = arith.subf %63, %66 : vector<8x128xf32>
      %68 = math.exp %67 : vector<8x128xf32>
      %cst_47 = arith.constant dense<0.000000e+00> : vector<8xf32>
      %69 = vector.multi_reduction <add>, %68, %cst_47 [1] : vector<8x128xf32> to vector<8xf32>
      %70 = vector.shape_cast %69 : vector<8xf32> to vector<8x1xf32>
      %71 = vector.broadcast %70 : vector<8x1xf32> to vector<8x128xf32>
      %72 = arith.divf %68, %71 : vector<8x128xf32>
      %73 = tpu.iota {dimensions = array<i32: 1>} : vector<8x128xi32>
      %cst_48 = arith.constant dense<0xFF800000> : vector<8xf32>
      %74 = vector.multi_reduction <maximumf>, %72, %cst_48 [1] : vector<8x128xf32> to vector<8xf32>
      %75 = vector.shape_cast %74 : vector<8xf32> to vector<8x1xf32>
      %76 = vector.broadcast %75 : vector<8x1xf32> to vector<8x128xf32>
      %77 = arith.cmpf oeq, %72, %76 : vector<8x128xf32>
      %c128_i32 = arith.constant 128 : i32
      %78 = vector.broadcast %c128_i32 : i32 to vector<8x128xi32>
      %79 = arith.select %77, %73, %78 : vector<8x128xi1>, vector<8x128xi32>
      %cst_49 = arith.constant dense<2147483647> : vector<8xi32>
      %80 = vector.multi_reduction <minsi>, %79, %cst_49 [1] : vector<8x128xi32> to vector<8xi32>
      %81 = vector.shape_cast %80 : vector<8xi32> to vector<8x1xi32>
      %82 = vector.broadcast %81 : vector<8x1xi32> to vector<8x128xi32>
      %83 = arith.cmpi eq, %73, %82 : vector<8x128xi32>
      %cst_50 = arith.constant 0xFF800000 : f32
      %84 = vector.broadcast %cst_50 : f32 to vector<8x128xf32>
      %85 = arith.select %83, %84, %72 : vector<8x128xi1>, vector<8x128xf32>
      %cst_51 = arith.constant dense<0xFF800000> : vector<8xf32>
      %86 = vector.multi_reduction <maximumf>, %85, %cst_51 [1] : vector<8x128xf32> to vector<8xf32>
      %87 = vector.shape_cast %86 : vector<8xf32> to vector<8x1xf32>
      %88 = vector.broadcast %87 : vector<8x1xf32> to vector<8x128xf32>
      %89 = arith.cmpf oeq, %85, %88 : vector<8x128xf32>
      %c128_i32_52 = arith.constant 128 : i32
      %90 = vector.broadcast %c128_i32_52 : i32 to vector<8x128xi32>
      %91 = arith.select %89, %73, %90 : vector<8x128xi1>, vector<8x128xi32>
      %cst_53 = arith.constant dense<2147483647> : vector<8xi32>
      %92 = vector.multi_reduction <minsi>, %91, %cst_53 [1] : vector<8x128xi32> to vector<8xi32>
      %93 = vector.shape_cast %92 : vector<8xi32> to vector<8x1xi32>
      %94 = vector.broadcast %93 : vector<8x1xi32> to vector<8x128xi32>
      %95 = arith.cmpi eq, %73, %94 : vector<8x128xi32>
      %96 = arith.ori %83, %95 : vector<8x128xi1>
      %97 = arith.extui %96 : vector<8x128xi1> to vector<8x128xi32>
      %98 = arith.sitofp %97 : vector<8x128xi32> to vector<8x128xf32>
      %c8_i32 = arith.constant 8 : i32
      %99 = arith.muli %arg0, %c8_i32 : i32
      %100 = tpu.iota {dimensions = array<i32: 0>} : vector<8x1xi32>
      %101 = vector.broadcast %99 : i32 to vector<8x1xi32>
      %102 = arith.addi %101, %100 : vector<8x1xi32>
      %c16_i32 = arith.constant 16 : i32
      %103 = vector.broadcast %c16_i32 : i32 to vector<8x1xi32>
      %104 = arith.cmpi slt, %102, %103 : vector<8x1xi32>
      %105 = arith.extui %104 : vector<8x1xi1> to vector<8x1xi32>
      %106 = arith.sitofp %105 : vector<8x1xi32> to vector<8x1xf32>
      %107 = vector.broadcast %106 : vector<8x1xf32> to vector<8x128xf32>
      %108 = arith.mulf %98, %107 : vector<8x128xf32>
      %109 = arith.mulf %72, %108 : vector<8x128xf32>
      %cst_54 = arith.constant dense<0.000000e+00> : vector<8xf32>
      %110 = vector.multi_reduction <add>, %109, %cst_54 [1] : vector<8x128xf32> to vector<8xf32>
      %111 = vector.shape_cast %110 : vector<8xf32> to vector<8x1xf32>
      %cst_55 = arith.constant 1.000000e-30 : f32
      %112 = vector.broadcast %cst_55 : f32 to vector<8x1xf32>
      %113 = arith.maximumf %111, %112 : vector<8x1xf32>
      %114 = vector.broadcast %113 : vector<8x1xf32> to vector<8x128xf32>
      %115 = arith.divf %109, %114 : vector<8x128xf32>
      %c0_i32_56 = arith.constant 0 : i32
      %116 = vector.broadcast %c0_i32_56 : i32 to vector<8x128xi32>
      %117 = arith.cmpi eq, %73, %116 : vector<8x128xi32>
      %118 = arith.extui %117 : vector<8x128xi1> to vector<8x128xi32>
      %119 = arith.sitofp %118 : vector<8x128xi32> to vector<8x128xf32>
      %120 = arith.mulf %115, %119 : vector<8x128xf32>
      %cst_57 = arith.constant dense<0.000000e+00> : vector<8xf32>
      %121 = vector.multi_reduction <add>, %120, %cst_57 [1] : vector<8x128xf32> to vector<8xf32>
      %122 = vector.shape_cast %121 : vector<8xf32> to vector<8x1xf32>
      %c0_58 = arith.constant 0 : index
      %c0_59 = arith.constant 0 : index
      %c0_60 = arith.constant 0 : index
      %123 = vector.load %arg14[%c0_58, %c0_59, %c0_60] : memref<2x8x1xf32, #tpu.memory_space<vmem>>, vector<1x8x1xf32>
      %124 = vector.shape_cast %123 : vector<1x8x1xf32> to vector<8x1xf32>
      %125 = vector.shape_cast %122 : vector<8x1xf32> to vector<1x8x1xf32>
      tpu.vector_store %arg14[%c0_58, %c0_59, %c0_60], %125 {strides = array<i32>} : memref<2x8x1xf32, #tpu.memory_space<vmem>>, vector<1x8x1xf32>,
      %c1_i32_61 = arith.constant 1 : i32
      %126 = vector.broadcast %c1_i32_61 : i32 to vector<8x128xi32>
      %127 = arith.cmpi eq, %73, %126 : vector<8x128xi32>
      %128 = arith.extui %127 : vector<8x128xi1> to vector<8x128xi32>
      %129 = arith.sitofp %128 : vector<8x128xi32> to vector<8x128xf32>
      %130 = arith.mulf %115, %129 : vector<8x128xf32>
      %cst_62 = arith.constant dense<0.000000e+00> : vector<8xf32>
      %131 = vector.multi_reduction <add>, %130, %cst_62 [1] : vector<8x128xf32> to vector<8xf32>
      %132 = vector.shape_cast %131 : vector<8xf32> to vector<8x1xf32>
      %c1 = arith.constant 1 : index
      %c0_63 = arith.constant 0 : index
      %c0_64 = arith.constant 0 : index
      %133 = vector.load %arg14[%c1, %c0_63, %c0_64] : memref<2x8x1xf32, #tpu.memory_space<vmem>>, vector<1x8x1xf32>
      %134 = vector.shape_cast %133 : vector<1x8x1xf32> to vector<8x1xf32>
      %135 = vector.shape_cast %132 : vector<8x1xf32> to vector<1x8x1xf32>
      tpu.vector_store %arg14[%c1, %c0_63, %c0_64], %135 {strides = array<i32>} : memref<2x8x1xf32, #tpu.memory_space<vmem>>, vector<1x8x1xf32>,
      %cst_65 = arith.constant dense<0.000000e+00> : vector<128xf32>
      %136 = vector.multi_reduction <add>, %108, %cst_65 [0] : vector<8x128xf32> to vector<128xf32>
      %137 = vector.shape_cast %136 : vector<128xf32> to vector<1x128xf32>
      %138 = vector.shape_cast %137 : vector<1x128xf32> to vector<1x128xf32>
      %139 = vector.broadcast %138 : vector<1x128xf32> to vector<8x128xf32>
      %c0_66 = arith.constant 0 : index
      %c0_67 = arith.constant 0 : index
      %c0_68 = arith.constant 0 : index
      %140 = vector.load %arg13[%c0_66, %c0_67, %c0_68] : memref<1x8x128xf32, #tpu.memory_space<vmem>>, vector<1x8x128xf32>
      %141 = vector.shape_cast %140 : vector<1x8x128xf32> to vector<8x128xf32>
      %142 = vector.shape_cast %139 : vector<8x128xf32> to vector<1x8x128xf32>
      tpu.vector_store %arg13[%c0_66, %c0_67, %c0_68], %142 {strides = array<i32>} : memref<1x8x128xf32, #tpu.memory_space<vmem>>, vector<1x8x128xf32>,
    } else {
    }
    %c0 = arith.constant 0 : index
    %c0_2 = arith.constant 0 : index
    %5 = vector.load %arg15[%c0, %c0_2] : memref<8x32xbf16, #tpu.memory_space<vmem>>, vector<8x32xbf16>
    %c0_3 = arith.constant 0 : index
    %c0_4 = arith.constant 0 : index
    %c0_5 = arith.constant 0 : index
    %6 = vector.load %arg6[%c0_3, %c0_4, %c0_5] : memref<1x32x64xbf16, #tpu.memory_space<vmem>>, vector<1x32x64xbf16>
    %7 = vector.shape_cast %6 : vector<1x32x64xbf16> to vector<32x64xbf16>
    %cst = arith.constant dense<0.000000e+00> : vector<8x64xf32>
    %8 = tpu.matmul %5, %7, %cst {dimension_numbers = #tpu.dot_dimension_numbers<[1], [0], [0], [1], [0, 0, 1, 1], [], []>} : vector<8x32xbf16>, vector<32x64xbf16>, vector<8x64xf32> -> vector<8x64xf32>
    %c0_6 = arith.constant 0 : index
    %c0_7 = arith.constant 0 : index
    %c0_8 = arith.constant 0 : index
    %9 = vector.load %arg7[%c0_6, %c0_7, %c0_8] : memref<1x1x64xf32, #tpu.memory_space<vmem>>, vector<1x1x64xf32>
    %10 = vector.shape_cast %9 : vector<1x1x64xf32> to vector<1x64xf32>
    %11 = vector.broadcast %10 : vector<1x64xf32> to vector<8x64xf32>
    %12 = arith.addf %8, %11 : vector<8x64xf32>
    %c0_9 = arith.constant 0 : index
    %c0_10 = arith.constant 0 : index
    %c0_11 = arith.constant 0 : index
    %13 = vector.load %arg8[%c0_9, %c0_10, %c0_11] : memref<1x32x64xbf16, #tpu.memory_space<vmem>>, vector<1x32x64xbf16>
    %14 = vector.shape_cast %13 : vector<1x32x64xbf16> to vector<32x64xbf16>
    %cst_12 = arith.constant dense<0.000000e+00> : vector<8x64xf32>
    %15 = tpu.matmul %5, %14, %cst_12 {dimension_numbers = #tpu.dot_dimension_numbers<[1], [0], [0], [1], [0, 0, 1, 1], [], []>} : vector<8x32xbf16>, vector<32x64xbf16>, vector<8x64xf32> -> vector<8x64xf32>
    %c0_13 = arith.constant 0 : index
    %c0_14 = arith.constant 0 : index
    %c0_15 = arith.constant 0 : index
    %16 = vector.load %arg9[%c0_13, %c0_14, %c0_15] : memref<1x1x64xf32, #tpu.memory_space<vmem>>, vector<1x1x64xf32>
    %17 = vector.shape_cast %16 : vector<1x1x64xf32> to vector<1x64xf32>
    %18 = vector.broadcast %17 : vector<1x64xf32> to vector<8x64xf32>
    %19 = arith.addf %15, %18 : vector<8x64xf32>
    %cst_16 = arith.constant 5.000000e-01 : f32
    %20 = vector.broadcast %cst_16 : f32 to vector<8x64xf32>
    %21 = arith.mulf %20, %12 : vector<8x64xf32>
    %22 = arith.mulf %12, %12 : vector<8x64xf32>
    %23 = arith.mulf %22, %12 : vector<8x64xf32>
    %cst_17 = arith.constant 4.471500e-02 : f32
    %24 = vector.broadcast %cst_17 : f32 to vector<8x64xf32>
    %25 = arith.mulf %24, %23 : vector<8x64xf32>
    %26 = arith.addf %12, %25 : vector<8x64xf32>
    %cst_18 = arith.constant 0.797884583 : f32
    %27 = vector.broadcast %cst_18 : f32 to vector<8x64xf32>
    %28 = arith.mulf %27, %26 : vector<8x64xf32>
    %29 = math.tanh %28 : vector<8x64xf32>
    %cst_19 = arith.constant 1.000000e+00 : f32
    %30 = vector.broadcast %cst_19 : f32 to vector<8x64xf32>
    %31 = arith.addf %30, %29 : vector<8x64xf32>
    %32 = arith.mulf %21, %31 : vector<8x64xf32>
    %33 = arith.mulf %32, %19 : vector<8x64xf32>
    %34 = arith.truncf %33 : vector<8x64xf32> to vector<8x64xbf16>
    %c0_20 = arith.constant 0 : index
    %c0_21 = arith.constant 0 : index
    %c0_22 = arith.constant 0 : index
    %35 = vector.load %arg10[%c0_20, %c0_21, %c0_22] : memref<1x64x32xbf16, #tpu.memory_space<vmem>>, vector<1x64x32xbf16>
    %36 = vector.shape_cast %35 : vector<1x64x32xbf16> to vector<64x32xbf16>
    %cst_23 = arith.constant dense<0.000000e+00> : vector<8x32xf32>
    %37 = tpu.matmul %34, %36, %cst_23 {dimension_numbers = #tpu.dot_dimension_numbers<[1], [0], [0], [1], [0, 0, 1, 1], [], []>} : vector<8x64xbf16>, vector<64x32xbf16>, vector<8x32xf32> -> vector<8x32xf32>
    %38 = arith.index_cast %arg1 : i32 to index
    %c0_24 = arith.constant 0 : index
    %c0_25 = arith.constant 0 : index
    %39 = vector.load %arg14[%38, %c0_24, %c0_25] : memref<2x8x1xf32, #tpu.memory_space<vmem>>, vector<1x8x1xf32>
    %40 = vector.shape_cast %39 : vector<1x8x1xf32> to vector<8x1xf32>
    %c0_26 = arith.constant 0 : index
    %c0_27 = arith.constant 0 : index
    %41 = vector.load %arg16[%c0_26, %c0_27] : memref<8x32xf32, #tpu.memory_space<vmem>>, vector<8x32xf32>
    %42 = vector.broadcast %40 : vector<8x1xf32> to vector<8x32xf32>
    %43 = arith.mulf %42, %37 : vector<8x32xf32>
    %44 = arith.addf %41, %43 : vector<8x32xf32>
    %c0_28 = arith.constant 0 : index
    %c0_29 = arith.constant 0 : index
    %45 = vector.load %arg16[%c0_28, %c0_29] : memref<8x32xf32, #tpu.memory_space<vmem>>, vector<8x32xf32>
    tpu.vector_store %arg16[%c0_28, %c0_29], %44 {strides = array<i32>} : memref<8x32xf32, #tpu.memory_space<vmem>>, vector<8x32xf32>,
    %c0_i32_30 = arith.constant 0 : i32
    %46 = arith.cmpi eq, %arg2, %c0_i32_30 : i32
    %47 = arith.extui %46 : i1 to i32
    %c0_i32_31 = arith.constant 0 : i32
    %48 = arith.cmpi ne, %47, %c0_i32_31 : i32
    scf.if %48 {
      %c0_34 = arith.constant 0 : index
      %c0_35 = arith.constant 0 : index
      %54 = vector.load %arg16[%c0_34, %c0_35] : memref<8x32xf32, #tpu.memory_space<vmem>>, vector<8x32xf32>
      %c0_36 = arith.constant 0 : index
      %c0_37 = arith.constant 0 : index
      %c0_38 = arith.constant 0 : index
      %55 = vector.load %arg11[%c0_36, %c0_37, %c0_38] : memref<1x1x32xf32, #tpu.memory_space<vmem>>, vector<1x1x32xf32>
      %56 = vector.shape_cast %55 : vector<1x1x32xf32> to vector<1x32xf32>
      %57 = vector.broadcast %40 : vector<8x1xf32> to vector<8x32xf32>
      %58 = vector.broadcast %56 : vector<1x32xf32> to vector<8x32xf32>
      %59 = arith.mulf %57, %58 : vector<8x32xf32>
      %60 = arith.addf %54, %59 : vector<8x32xf32>
      %c0_39 = arith.constant 0 : index
      %c0_40 = arith.constant 0 : index
      %61 = vector.load %arg16[%c0_39, %c0_40] : memref<8x32xf32, #tpu.memory_space<vmem>>, vector<8x32xf32>
      tpu.vector_store %arg16[%c0_39, %c0_40], %60 {strides = array<i32>} : memref<8x32xf32, #tpu.memory_space<vmem>>, vector<8x32xf32>,
    } else {
    }
    %c1_i32 = arith.constant 1 : i32
    %49 = arith.cmpi eq, %arg1, %c1_i32 : i32
    %c0_i32_32 = arith.constant 0 : i32
    %50 = arith.cmpi eq, %arg2, %c0_i32_32 : i32
    %51 = arith.andi %49, %50 : i1
    %52 = arith.extui %51 : i1 to i32
    %c0_i32_33 = arith.constant 0 : i32
    %53 = arith.cmpi ne, %52, %c0_i32_33 : i32
    scf.if %53 {
      %c0_34 = arith.constant 0 : index
      %c0_35 = arith.constant 0 : index
      %54 = vector.load %arg16[%c0_34, %c0_35] : memref<8x32xf32, #tpu.memory_space<vmem>>, vector<8x32xf32>
      %c0_36 = arith.constant 0 : index
      %c0_37 = arith.constant 0 : index
      %55 = vector.load %arg12[%c0_36, %c0_37] : memref<8x32xf32, #tpu.memory_space<vmem>>, vector<8x32xf32>
      tpu.vector_store %arg12[%c0_36, %c0_37], %54 {strides = array<i32>} : memref<8x32xf32, #tpu.memory_space<vmem>>, vector<8x32xf32>,
    } else {
    }
    return
  }
  func.func @transform_0(%arg0: i32, %arg1: i32, %arg2: i32) -> (i32, i32) {
    %c0_i32 = arith.constant 0 : i32
    %c0_i32_0 = arith.constant 0 : i32
    return %arg0, %c0_i32 : i32, i32
  }
  func.func @transform_1(%arg0: i32, %arg1: i32, %arg2: i32) -> (i32, i32) {
    %c0_i32 = arith.constant 0 : i32
    %c0_i32_0 = arith.constant 0 : i32
    %c0_i32_1 = arith.constant 0 : i32
    return %c0_i32, %c0_i32_0 : i32, i32
  }
  func.func @transform_2(%arg0: i32, %arg1: i32, %arg2: i32) -> (i32, i32) {
    %c0_i32 = arith.constant 0 : i32
    %c0_i32_0 = arith.constant 0 : i32
    %c0_i32_1 = arith.constant 0 : i32
    return %c0_i32, %c0_i32_0 : i32, i32
  }
  func.func @transform_3(%arg0: i32, %arg1: i32, %arg2: i32) -> (i32, i32, i32) {
    %c0_i32 = arith.constant 0 : i32
    %c0_i32_0 = arith.constant 0 : i32
    return %arg1, %c0_i32, %arg2 : i32, i32, i32
  }
  func.func @transform_4(%arg0: i32, %arg1: i32, %arg2: i32) -> (i32, i32, i32) {
    %c0_i32 = arith.constant 0 : i32
    %c0_i32_0 = arith.constant 0 : i32
    return %arg1, %c0_i32, %arg2 : i32, i32, i32
  }
  func.func @transform_5(%arg0: i32, %arg1: i32, %arg2: i32) -> (i32, i32, i32) {
    %c0_i32 = arith.constant 0 : i32
    %c0_i32_0 = arith.constant 0 : i32
    return %arg1, %c0_i32, %arg2 : i32, i32, i32
  }
  func.func @transform_6(%arg0: i32, %arg1: i32, %arg2: i32) -> (i32, i32, i32) {
    %c0_i32 = arith.constant 0 : i32
    %c0_i32_0 = arith.constant 0 : i32
    return %arg1, %c0_i32, %arg2 : i32, i32, i32
  }
  func.func @transform_7(%arg0: i32, %arg1: i32, %arg2: i32) -> (i32, i32, i32) {
    %c0_i32 = arith.constant 0 : i32
    %c0_i32_0 = arith.constant 0 : i32
    return %arg1, %arg2, %c0_i32 : i32, i32, i32
  }
  func.func @transform_8(%arg0: i32, %arg1: i32, %arg2: i32) -> (i32, i32, i32) {
    %c0_i32 = arith.constant 0 : i32
    %c0_i32_0 = arith.constant 0 : i32
    %c0_i32_1 = arith.constant 0 : i32
    return %arg1, %c0_i32, %c0_i32_0 : i32, i32, i32
  }
  func.func @transform_9(%arg0: i32, %arg1: i32, %arg2: i32) -> (i32, i32) {
    %c0_i32 = arith.constant 0 : i32
    %c0_i32_0 = arith.constant 0 : i32
    return %arg0, %c0_i32 : i32, i32
  }
  func.func @transform_10(%arg0: i32, %arg1: i32, %arg2: i32) -> (i32, i32, i32) {
    %c0_i32 = arith.constant 0 : i32
    %c0_i32_0 = arith.constant 0 : i32
    %c0_i32_1 = arith.constant 0 : i32
    return %arg0, %c0_i32, %c0_i32_0 : i32, i32, i32
  }
}

</mosaic_0001>

<llo_original>
// kernel: tpu_custom_call.1
$region0: #{tpu_custom_call.1}
  #allocation0 [shape = 'u32[]', space=smem, size = 0x4, offset = 0x4, fixed_abs, tag = 'smem constant byte address 0x4 - core index']
  #allocation1 [shape = 'u32[144,128]{1,0:T(1,128)}', space=vmem, size = 0x12000, scoped, tag = 'internal scratch']
  #allocation2 [shape = 'f32[2,8,1]{2,1,0:T(8,128)}', space=vmem, size = 0x2000, scoped, tag = 'scratch operand']
  #allocation3 [shape = 'bf16[8,32]{1,0:T(8,128)(2,1)}', space=vmem, size = 0x800, scoped, tag = 'scratch operand']
  #allocation4 [shape = 'f32[8,32]{1,0:T(8,128)}', space=vmem, size = 0x1000, scoped, tag = 'scratch operand']
  %s0 = inlined_call_operand.hbm [shape: f32[16,32], index: 0, kind: input, shape index: {}]
  %s1 = inlined_call_operand.vmem [shape: f32[32,128], index: 1, kind: input, shape index: {}]
  %s2 = inlined_call_operand.vmem [shape: f32[1,128], index: 2, kind: input, shape index: {}]
  %s3 = inlined_call_operand.vmem [shape: bf16[2,32,64], index: 3, kind: input, shape index: {}]
  %s4 = inlined_call_operand.vmem [shape: f32[2,1,64], index: 4, kind: input, shape index: {}]
  %s5 = inlined_call_operand.vmem [shape: bf16[2,32,64], index: 5, kind: input, shape index: {}]
  %s6 = inlined_call_operand.vmem [shape: f32[2,1,64], index: 6, kind: input, shape index: {}]
  %s7 = inlined_call_operand.vmem [shape: bf16[2,64,32], index: 7, kind: input, shape index: {}]
  %s8 = inlined_call_operand.vmem [shape: f32[2,1,32], index: 8, kind: input, shape index: {}]
  %s9 = inlined_call_operand.hbm [shape: f32[16,32], index: 9, kind: output, shape index: {0}]
  %s10 = inlined_call_operand.hbm [shape: f32[2,8,128], index: 10, kind: output, shape index: {1}]
  %11 = xla_tuple %s9, %s10
  %s12 = sld [smem:[#allocation0]]
  $region93: #{tpu_custom_call.1} parent=0
    _
  %s14 = ssub.s32 1, %s12
  %s15 = scalar_select 0, %s14, %s12
  $region1: #{tpu_custom_call.1} parent=0
    #allocation5 [shape = 'u8[8192]{0}', space=vmem, size = 0x2000, scoped, tag = 'input window, operand 0']
    #allocation6 [shape = 's32[2]{0}', space=sflag, size = 0x8, scoped, tag = 'scoped memory for tpu_custom_call.1']
    #allocation7 [shape = 's32[2]{0}', space=sflag, size = 0x8, scoped, tag = 'scoped memory for tpu_custom_call.1']
    #allocation8 [shape = 'u8[8192]{0}', space=vmem, size = 0x2000, scoped, tag = 'output window, operand 0']
    #allocation9 [shape = 'u8[8192]{0}', space=vmem, size = 0x2000, scoped, tag = 'output window, operand 1']
    #allocation10 [shape = 's32[2]{0}', space=sflag, size = 0x8, scoped, tag = 'scoped memory for tpu_custom_call.1']
    %16 = vsyncpa [#allocation6], 0
    %s17 = scalar_lea.sflag [#allocation6], 1
    %18 = vsyncpa %s17, 0
    %19 = vsyncpa [#allocation7], 0
    %s20 = scalar_lea.sflag [#allocation7], 1
    %21 = vsyncpa %s20, 0
    %22 = vsyncpa [#allocation10], 0
    %s23 = scalar_lea.sflag [#allocation10], 1
    %24 = vsyncpa %s23, 0
    loop: start=0, step=1, limit=6
    $region2: #{tpu_custom_call.1} parent=1 // loop_pre_header
      _
    $region3: #{tpu_custom_call.1} parent=1 // loop_header
      %s26 = sphi 0, %s30
      %p27 = scmp.ge.s32.totalorder %s26, 6
      %s33 = sphi 0, %s52
      %s34 = sphi 0, %s48
      %s35 = sphi 0, %s44
      %s36 = sphi 0, %s33
      %s37 = sphi 0, %s34
      %s38 = sphi 0, %s35
      %s39 = sphi 0, %s36
      %s40 = sphi 0, %s37
      %s41 = sphi 0, %s38
      %s55 = sphi 0, %s57
      %s58 = sphi 0, %s55
      %s59 = sphi 0, %s58
      %s75 = sphi 0, %s59
      %s79 = sphi 0, %s79
      %s81 = sphi 0, %s79
      %s82 = sphi 0, %s81
      %s96 = sphi 0, %s82
      %s100 = sphi 0, %s100
      %s102 = sphi 0, %s100
      %s103 = sphi 0, %s102
      %s117 = sphi 0, %s103
      %s125 = sphi 0, %s127
      %s128 = sphi 0, %s125
      %s129 = sphi 0, %s128
      %s145 = sphi 0, %s129
      %s153 = sphi 0, %s155
      %s156 = sphi 0, %s153
      %s157 = sphi 0, %s156
      %s173 = sphi 0, %s157
      %s181 = sphi 0, %s183
      %s184 = sphi 0, %s181
      %s185 = sphi 0, %s184
      %s201 = sphi 0, %s185
      %s209 = sphi 0, %s211
      %s212 = sphi 0, %s209
      %s213 = sphi 0, %s212
      %s229 = sphi 0, %s213
      %s237 = sphi 0, %s239
      %s240 = sphi 0, %s237
      %s241 = sphi 0, %s240
      %s257 = sphi 0, %s241
      %s263 = sphi 0, %s265
      %s266 = sphi 0, %s263
      %s267 = sphi 0, %s266
      %s283 = sphi 0, %s267
      %s289 = sphi 0, %s291
      %s292 = sphi 0, %s289
      %s293 = sphi 0, %s292
      %s309 = sphi 0, %s293
      %s315 = sphi 0, %s317
      %s318 = sphi 0, %s315
      %s319 = sphi 0, %s318
      %s335 = sphi 0, %s319
    $region4: #{tpu_custom_call.1} parent=1 // loop_header_branch
      %29 = sbr.rel (%p27) target = $region8
    $region5: #{tpu_custom_call.1} parent=1 // loop_body
      %s31 = ssub.s32 %s26, 1
      %s32 = ssub.s32 %s26, 2
      %s42 = sadd.s32 1, %s35
      %p43 = scmp.ge.s32.totalorder %s42, 1
      %s44 = scalar_select %p43, 0, %s42
      %s45 = sadd.s32 1, %s34
      %s46 = scalar_select %p43, %s45, %s34
      %p47 = scmp.ge.s32.totalorder %s46, 2
      %s48 = scalar_select %p47, 0, %s46
      %s49 = sadd.s32 1, %s33
      %s50 = scalar_select %p47, %s49, %s33
      %p51 = scmp.ge.s32.totalorder %s50, 2
      %s52 = scalar_select %p51, 0, %s50
      %s53 = ssub.s32 %s33, %s52
      %p54 = scmp.eq.s32.totalorder %s53, 0
      %s56 = sadd.s32 %s55, 1
      %s57 = scalar_select %p54, %s55, %s56
      %p60 = pneg %p54
      %p61 = scmp.eq.s32.totalorder %s26, 3
      %p62 = por %p60, %p61
      %p63 = scmp.ne.s32.totalorder %s55, %s58
      %p64 = scmp.eq.s32.totalorder %s26, 0
      %p65 = por %p63, %p64
      %p66 = scmp.ne.s32.totalorder %s55, %s58
      %p67 = scmp.eq.s32.totalorder %s31, 3
      %p68 = por %p66, %p67
      %p69 = scmp.ne.s32.totalorder %s58, %s59
      %p70 = scmp.eq.s32.totalorder %s31, 0
      %p71 = por %p69, %p70
      %p72 = scmp.ne.s32.totalorder %s58, %s59
      %p73 = scmp.eq.s32.totalorder %s32, 3
      %p74 = por %p72, %p73
      %p76 = scmp.ne.s32.totalorder %s59, %s75
      %p77 = scmp.eq.s32.totalorder %s32, 0
      %p78 = por %p76, %p77
      %s80 = sadd.s32 %s79, 1
      %p83 = scmp.eq.s32.totalorder %s26, 3
      %p84 = scmp.ne.s32.totalorder %s79, %s81
      %p85 = scmp.eq.s32.totalorder %s26, 0
      %p86 = por %p84, %p85
      %p87 = scmp.ne.s32.totalorder %s79, %s81
      %p88 = scmp.eq.s32.totalorder %s31, 3
      %p89 = por %p87, %p88
      %p90 = scmp.ne.s32.totalorder %s81, %s82
      %p91 = scmp.eq.s32.totalorder %s31, 0
      %p92 = por %p90, %p91
      %p93 = scmp.ne.s32.totalorder %s81, %s82
      %p94 = scmp.eq.s32.totalorder %s32, 3
      %p95 = por %p93, %p94
      %p97 = scmp.ne.s32.totalorder %s82, %s96
      %p98 = scmp.eq.s32.totalorder %s32, 0
      %p99 = por %p97, %p98
      %s101 = sadd.s32 %s100, 1
      %p104 = scmp.eq.s32.totalorder %s26, 3
      %p105 = scmp.ne.s32.totalorder %s100, %s102
      %p106 = scmp.eq.s32.totalorder %s26, 0
      %p107 = por %p105, %p106
      %p108 = scmp.ne.s32.totalorder %s100, %s102
      %p109 = scmp.eq.s32.totalorder %s31, 3
      %p110 = por %p108, %p109
      %p111 = scmp.ne.s32.totalorder %s102, %s103
      %p112 = scmp.eq.s32.totalorder %s31, 0
      %p113 = por %p111, %p112
      %p114 = scmp.ne.s32.totalorder %s102, %s103
      %p115 = scmp.eq.s32.totalorder %s32, 3
      %p116 = por %p114, %p115
      %p118 = scmp.ne.s32.totalorder %s103, %s117
      %p119 = scmp.eq.s32.totalorder %s32, 0
      %p120 = por %p118, %p119
      %s121 = ssub.s32 %s34, %s48
      %s122 = ssub.s32 %s35, %s44
      %s123 = sor.u32 %s121, %s122
      %p124 = scmp.eq.s32.totalorder %s123, 0
      %s126 = sadd.s32 %s125, 1
      %s127 = scalar_select %p124, %s125, %s126
      %p130 = pneg %p124
      %p131 = scmp.eq.s32.totalorder %s26, 3
      %p132 = por %p130, %p131
      %p133 = scmp.ne.s32.totalorder %s125, %s128
      %p134 = scmp.eq.s32.totalorder %s26, 0
      %p135 = por %p133, %p134
      %p136 = scmp.ne.s32.totalorder %s125, %s128
      %p137 = scmp.eq.s32.totalorder %s31, 3
      %p138 = por %p136, %p137
      %p139 = scmp.ne.s32.totalorder %s128, %s129
      %p140 = scmp.eq.s32.totalorder %s31, 0
      %p141 = por %p139, %p140
      %p142 = scmp.ne.s32.totalorder %s128, %s129
      %p143 = scmp.eq.s32.totalorder %s32, 3
      %p144 = por %p142, %p143
      %p146 = scmp.ne.s32.totalorder %s129, %s145
      %p147 = scmp.eq.s32.totalorder %s32, 0
      %p148 = por %p146, %p147
      %s149 = ssub.s32 %s34, %s48
      %s150 = ssub.s32 %s35, %s44
      %s151 = sor.u32 %s149, %s150
      %p152 = scmp.eq.s32.totalorder %s151, 0
      %s154 = sadd.s32 %s153, 1
      %s155 = scalar_select %p152, %s153, %s154
      %p158 = pneg %p152
      %p159 = scmp.eq.s32.totalorder %s26, 3
      %p160 = por %p158, %p159
      %p161 = scmp.ne.s32.totalorder %s153, %s156
      %p162 = scmp.eq.s32.totalorder %s26, 0
      %p163 = por %p161, %p162
      %p164 = scmp.ne.s32.totalorder %s153, %s156
      %p165 = scmp.eq.s32.totalorder %s31, 3
      %p166 = por %p164, %p165
      %p167 = scmp.ne.s32.totalorder %s156, %s157
      %p168 = scmp.eq.s32.totalorder %s31, 0
      %p169 = por %p167, %p168
      %p170 = scmp.ne.s32.totalorder %s156, %s157
      %p171 = scmp.eq.s32.totalorder %s32, 3
      %p172 = por %p170, %p171
      %p174 = scmp.ne.s32.totalorder %s157, %s173
      %p175 = scmp.eq.s32.totalorder %s32, 0
      %p176 = por %p174, %p175
      %s177 = ssub.s32 %s34, %s48
      %s178 = ssub.s32 %s35, %s44
      %s179 = sor.u32 %s177, %s178
      %p180 = scmp.eq.s32.totalorder %s179, 0
      %s182 = sadd.s32 %s181, 1
      %s183 = scalar_select %p180, %s181, %s182
      %p186 = pneg %p180
      %p187 = scmp.eq.s32.totalorder %s26, 3
      %p188 = por %p186, %p187
      %p189 = scmp.ne.s32.totalorder %s181, %s184
      %p190 = scmp.eq.s32.totalorder %s26, 0
      %p191 = por %p189, %p190
      %p192 = scmp.ne.s32.totalorder %s181, %s184
      %p193 = scmp.eq.s32.totalorder %s31, 3
      %p194 = por %p192, %p193
      %p195 = scmp.ne.s32.totalorder %s184, %s185
      %p196 = scmp.eq.s32.totalorder %s31, 0
      %p197 = por %p195, %p196
      %p198 = scmp.ne.s32.totalorder %s184, %s185
      %p199 = scmp.eq.s32.totalorder %s32, 3
      %p200 = por %p198, %p199
      %p202 = scmp.ne.s32.totalorder %s185, %s201
      %p203 = scmp.eq.s32.totalorder %s32, 0
      %p204 = por %p202, %p203
      %s205 = ssub.s32 %s34, %s48
      %s206 = ssub.s32 %s35, %s44
      %s207 = sor.u32 %s205, %s206
      %p208 = scmp.eq.s32.totalorder %s207, 0
      %s210 = sadd.s32 %s209, 1
      %s211 = scalar_select %p208, %s209, %s210
      %p214 = pneg %p208
      %p215 = scmp.eq.s32.totalorder %s26, 3
      %p216 = por %p214, %p215
      %p217 = scmp.ne.s32.totalorder %s209, %s212
      %p218 = scmp.eq.s32.totalorder %s26, 0
      %p219 = por %p217, %p218
      %p220 = scmp.ne.s32.totalorder %s209, %s212
      %p221 = scmp.eq.s32.totalorder %s31, 3
      %p222 = por %p220, %p221
      %p223 = scmp.ne.s32.totalorder %s212, %s213
      %p224 = scmp.eq.s32.totalorder %s31, 0
      %p225 = por %p223, %p224
      %p226 = scmp.ne.s32.totalorder %s212, %s213
      %p227 = scmp.eq.s32.totalorder %s32, 3
      %p228 = por %p226, %p227
      %p230 = scmp.ne.s32.totalorder %s213, %s229
      %p231 = scmp.eq.s32.totalorder %s32, 0
      %p232 = por %p230, %p231
      %s233 = ssub.s32 %s34, %s48
      %s234 = ssub.s32 %s35, %s44
      %s235 = sor.u32 %s233, %s234
      %p236 = scmp.eq.s32.totalorder %s235, 0
      %s238 = sadd.s32 %s237, 1
      %s239 = scalar_select %p236, %s237, %s238
      %p242 = pneg %p236
      %p243 = scmp.eq.s32.totalorder %s26, 3
      %p244 = por %p242, %p243
      %p245 = scmp.ne.s32.totalorder %s237, %s240
      %p246 = scmp.eq.s32.totalorder %s26, 0
      %p247 = por %p245, %p246
      %p248 = scmp.ne.s32.totalorder %s237, %s240
      %p249 = scmp.eq.s32.totalorder %s31, 3
      %p250 = por %p248, %p249
      %p251 = scmp.ne.s32.totalorder %s240, %s241
      %p252 = scmp.eq.s32.totalorder %s31, 0
      %p253 = por %p251, %p252
      %p254 = scmp.ne.s32.totalorder %s240, %s241
      %p255 = scmp.eq.s32.totalorder %s32, 3
      %p256 = por %p254, %p255
      %p258 = scmp.ne.s32.totalorder %s241, %s257
      %p259 = scmp.eq.s32.totalorder %s32, 0
      %p260 = por %p258, %p259
      %s261 = ssub.s32 %s34, %s48
      %p262 = scmp.eq.s32.totalorder %s261, 0
      %s264 = sadd.s32 %s263, 1
      %s265 = scalar_select %p262, %s263, %s264
      %p268 = pneg %p262
      %p269 = scmp.eq.s32.totalorder %s26, 3
      %p270 = por %p268, %p269
      %p271 = scmp.ne.s32.totalorder %s263, %s266
      %p272 = scmp.eq.s32.totalorder %s26, 0
      %p273 = por %p271, %p272
      %p274 = scmp.ne.s32.totalorder %s263, %s266
      %p275 = scmp.eq.s32.totalorder %s31, 3
      %p276 = por %p274, %p275
      %p277 = scmp.ne.s32.totalorder %s266, %s267
      %p278 = scmp.eq.s32.totalorder %s31, 0
      %p279 = por %p277, %p278
      %p280 = scmp.ne.s32.totalorder %s266, %s267
      %p281 = scmp.eq.s32.totalorder %s32, 3
      %p282 = por %p280, %p281
      %p284 = scmp.ne.s32.totalorder %s267, %s283
      %p285 = scmp.eq.s32.totalorder %s32, 0
      %p286 = por %p284, %p285
      %s287 = ssub.s32 %s33, %s52
      %p288 = scmp.eq.s32.totalorder %s287, 0
      %s290 = sadd.s32 %s289, 1
      %s291 = scalar_select %p288, %s289, %s290
      %p294 = pneg %p288
      %p295 = scmp.eq.s32.totalorder %s26, 3
      %p296 = por %p294, %p295
      %p297 = scmp.ne.s32.totalorder %s289, %s292
      %p298 = scmp.eq.s32.totalorder %s26, 0
      %p299 = por %p297, %p298
      %p300 = scmp.ne.s32.totalorder %s289, %s292
      %p301 = scmp.eq.s32.totalorder %s31, 3
      %p302 = por %p300, %p301
      %p303 = scmp.ne.s32.totalorder %s292, %s293
      %p304 = scmp.eq.s32.totalorder %s31, 0
      %p305 = por %p303, %p304
      %p306 = scmp.ne.s32.totalorder %s292, %s293
      %p307 = scmp.eq.s32.totalorder %s32, 3
      %p308 = por %p306, %p307
      %p310 = scmp.ne.s32.totalorder %s293, %s309
      %p311 = scmp.eq.s32.totalorder %s32, 0
      %p312 = por %p310, %p311
      %s313 = ssub.s32 %s33, %s52
      %p314 = scmp.eq.s32.totalorder %s313, 0
      %s316 = sadd.s32 %s315, 1
      %s317 = scalar_select %p314, %s315, %s316
      %p320 = pneg %p314
      %p321 = scmp.eq.s32.totalorder %s26, 3
      %p322 = por %p320, %p321
      %p323 = scmp.ne.s32.totalorder %s315, %s318
      %p324 = scmp.eq.s32.totalorder %s26, 0
      %p325 = por %p323, %p324
      %p326 = scmp.ne.s32.totalorder %s315, %s318
      %p327 = scmp.eq.s32.totalorder %s31, 3
      %p328 = por %p326, %p327
      %p329 = scmp.ne.s32.totalorder %s318, %s319
      %p330 = scmp.eq.s32.totalorder %s31, 0
      %p331 = por %p329, %p330
      %p332 = scmp.ne.s32.totalorder %s318, %s319
      %p333 = scmp.eq.s32.totalorder %s32, 3
      %p334 = por %p332, %p333
      %p336 = scmp.ne.s32.totalorder %s319, %s335
      %p337 = scmp.eq.s32.totalorder %s32, 0
      %p338 = por %p336, %p337
      %p339 = scmp.le.s32.totalorder 1, %s26
      %p340 = scmp.lt.s32.totalorder %s26, 5
      %p341 = pnand %p339, %p340
      %p342 = pneg %p341
      // Predicated region
      $region9: #{tpu_custom_call.1} parent=5 // pred_check
        _
      $region10: #{tpu_custom_call.1} parent=5 // pred_check_branch
        %344 = sbr.rel (%p341) target = $region12
      $region11: #{tpu_custom_call.1} parent=5 // pred_region
        %s345 = ssub.s32 %s26, 1
        // Predicated region
        $region13: #{tpu_custom_call.1} parent=11 // pred_check
          %p346 = pneg %p92
        $region14: #{tpu_custom_call.1} parent=11 // pred_check_branch
          %348 = sbr.rel (%p346) target = $region16
        $region15: #{tpu_custom_call.1} parent=11 // pred_region
          _
        $region16: #{tpu_custom_call.1} parent=11 // pred_fallthru
          _
        // Predicated region
        $region17: #{tpu_custom_call.1} parent=11 // pred_check
          %p349 = pneg %p113
        $region18: #{tpu_custom_call.1} parent=11 // pred_check_branch
          %351 = sbr.rel (%p349) target = $region20
        $region19: #{tpu_custom_call.1} parent=11 // pred_region
          _
        $region20: #{tpu_custom_call.1} parent=11 // pred_fallthru
          _
      $region12: #{tpu_custom_call.1} parent=5 // pred_fallthru
        _
      %p352 = scmp.lt.s32.totalorder %s26, 4
      // Predicated region
      $region21: #{tpu_custom_call.1} parent=5 // pred_check
        %p353 = pneg %p352
      $region22: #{tpu_custom_call.1} parent=5 // pred_check_branch
        %355 = sbr.rel (%p353) target = $region24
      $region23: #{tpu_custom_call.1} parent=5 // pred_region
        // Predicated region
        $region25: #{tpu_custom_call.1} parent=23 // pred_check
          %p356 = pneg %p65
        $region26: #{tpu_custom_call.1} parent=23 // pred_check_branch
          %358 = sbr.rel (%p356) target = $region28
        $region27: #{tpu_custom_call.1} parent=23 // pred_region
          %s359 = sand.u32 %s55, 1
          %s360 = scalar_lea.sflag [#allocation6], %s359
          %s361 = sand.u32 %s55, 1
          %s362 = smul.addr %s361, 8
          %s363 = scalar_lea.vmem [#allocation5], %s362
          %s365 = ssub.s32 128, 128
          %366 = vsyncadd %s360, %s365
          %s367 = smul.addr %s33, 128
          %s368 = scalar_lea.hbm %s0, %s367
          %s370 = sshll.u32 %s363, 4
          %s371 = int_to_ptr.vmem [resolvable:$true] %s370
          %373 = dma.hbm_to_vmem [thread:$0]  %s368, 128, %s371, %s360
        $region28: #{tpu_custom_call.1} parent=23 // pred_fallthru
          _
        // Predicated region
        $region29: #{tpu_custom_call.1} parent=23 // pred_check
          %p374 = pneg %p135
        $region30: #{tpu_custom_call.1} parent=23 // pred_check_branch
          %376 = sbr.rel (%p374) target = $region32
        $region31: #{tpu_custom_call.1} parent=23 // pred_region
          %p377 = scmp.lt.s32.totalorder %s34, 1
          %s378 = scalar_select %p377, %s34, 1
          %p379 = scmp.lt.s32.totalorder %s35, 0
          %s380 = scalar_select %p379, %s35, 0
          %s381 = smul.addr %s378, 4
          %s382 = sadd.s32 %s380, %s381
          %s383 = smul.addr %s382, 4
          %s384 = scalar_lea.vmem %s3, %s383
        $region32: #{tpu_custom_call.1} parent=23 // pred_fallthru
          _
        // Predicated region
        $region33: #{tpu_custom_call.1} parent=23 // pred_check
          %p385 = pneg %p163
        $region34: #{tpu_custom_call.1} parent=23 // pred_check_branch
          %387 = sbr.rel (%p385) target = $region36
        $region35: #{tpu_custom_call.1} parent=23 // pred_region
          %p388 = scmp.lt.s32.totalorder %s34, 1
          %s389 = scalar_select %p388, %s34, 1
          %p390 = scmp.lt.s32.totalorder %s35, 0
          %s391 = scalar_select %p390, %s35, 0
          %s392 = sadd.s32 %s391, %s389
          %s393 = scalar_lea.vmem %s4, %s392
        $region36: #{tpu_custom_call.1} parent=23 // pred_fallthru
          _
        // Predicated region
        $region37: #{tpu_custom_call.1} parent=23 // pred_check
          %p394 = pneg %p191
        $region38: #{tpu_custom_call.1} parent=23 // pred_check_branch
          %396 = sbr.rel (%p394) target = $region40
        $region39: #{tpu_custom_call.1} parent=23 // pred_region
          %p397 = scmp.lt.s32.totalorder %s34, 1
          %s398 = scalar_select %p397, %s34, 1
          %p399 = scmp.lt.s32.totalorder %s35, 0
          %s400 = scalar_select %p399, %s35, 0
          %s401 = smul.addr %s398, 4
          %s402 = sadd.s32 %s400, %s401
          %s403 = smul.addr %s402, 4
          %s404 = scalar_lea.vmem %s5, %s403
        $region40: #{tpu_custom_call.1} parent=23 // pred_fallthru
          _
        // Predicated region
        $region41: #{tpu_custom_call.1} parent=23 // pred_check
          %p405 = pneg %p219
        $region42: #{tpu_custom_call.1} parent=23 // pred_check_branch
          %407 = sbr.rel (%p405) target = $region44
        $region43: #{tpu_custom_call.1} parent=23 // pred_region
          %p408 = scmp.lt.s32.totalorder %s34, 1
          %s409 = scalar_select %p408, %s34, 1
          %p410 = scmp.lt.s32.totalorder %s35, 0
          %s411 = scalar_select %p410, %s35, 0
          %s412 = sadd.s32 %s411, %s409
          %s413 = scalar_lea.vmem %s6, %s412
        $region44: #{tpu_custom_call.1} parent=23 // pred_fallthru
          _
        // Predicated region
        $region45: #{tpu_custom_call.1} parent=23 // pred_check
          %p414 = pneg %p247
        $region46: #{tpu_custom_call.1} parent=23 // pred_check_branch
          %416 = sbr.rel (%p414) target = $region48
        $region47: #{tpu_custom_call.1} parent=23 // pred_region
          %s417 = smul.u32 8, %s35
          %p418 = scmp.lt.s32.totalorder %s34, 1
          %s419 = scalar_select %p418, %s34, 1
          %p420 = scmp.lt.s32.totalorder %s417, 7
          %s421 = scalar_select %p420, %s417, 7
          %s422 = smul.addr %s419, 8
          %s423 = sadd.s32 %s421, %s422
          %s424 = smul.addr %s423, 4
          %s425 = scalar_lea.vmem %s7, %s424
          %s426 = smul.u32 8, %s35
        $region48: #{tpu_custom_call.1} parent=23 // pred_fallthru
          _
        // Predicated region
        $region49: #{tpu_custom_call.1} parent=23 // pred_check
          %p427 = pneg %p273
        $region50: #{tpu_custom_call.1} parent=23 // pred_check_branch
          %429 = sbr.rel (%p427) target = $region52
        $region51: #{tpu_custom_call.1} parent=23 // pred_region
          %p430 = scmp.lt.s32.totalorder %s34, 1
          %s431 = scalar_select %p430, %s34, 1
          %s432 = scalar_lea.vmem %s8, %s431
        $region52: #{tpu_custom_call.1} parent=23 // pred_fallthru
          _
      $region24: #{tpu_custom_call.1} parent=5 // pred_fallthru
        _
      %p433 = scmp.le.s32.totalorder 1, %s26
      %p434 = scmp.lt.s32.totalorder %s26, 5
      %p435 = pnand %p433, %p434
      %p436 = pneg %p435
      // Predicated region
      $region53: #{tpu_custom_call.1} parent=5 // pred_check
        _
      $region54: #{tpu_custom_call.1} parent=5 // pred_check_branch
        %438 = sbr.rel (%p435) target = $region56
      $region55: #{tpu_custom_call.1} parent=5 // pred_region
        %s439 = ssub.s32 %s26, 1
        %s440 = sand.u32 %s58, 1
        %s441 = scalar_lea.sflag [#allocation6], %s440
        %s442 = sand.u32 %s58, 1
        %s443 = smul.addr %s442, 8
        %s444 = scalar_lea.vmem [#allocation5], %s443
        // Predicated region
        $region57: #{tpu_custom_call.1} parent=55 // pred_check
          %p445 = pneg %p71
        $region58: #{tpu_custom_call.1} parent=55 // pred_check_branch
          %447 = sbr.rel (%p445) target = $region60
        $region59: #{tpu_custom_call.1} parent=55 // pred_region
          %448 = dma.done %s441, 128
        $region60: #{tpu_custom_call.1} parent=55 // pred_fallthru
          _
        %s449 = sand.u32 %s58, 1
        %s450 = scalar_lea.sflag [#allocation6], %s449
        %s451 = sand.u32 %s58, 1
        %s452 = smul.addr %s451, 8
        %s453 = scalar_lea.vmem [#allocation5], %s452
        %p454 = pneg %p71
        %p455 = pneg %p68
        %p456 = pneg %p92
        %p457 = pneg %p89
        %p458 = pneg %p113
        %p459 = pneg %p110
        %p460 = scmp.lt.s32.totalorder %s37, 1
        %s461 = scalar_select %p460, %s37, 1
        %p462 = scmp.lt.s32.totalorder %s38, 0
        %s463 = scalar_select %p462, %s38, 0
        %s464 = smul.addr %s461, 4
        %s465 = sadd.s32 %s463, %s464
        %s466 = smul.addr %s465, 4
        %s467 = scalar_lea.vmem %s3, %s466
        %p468 = pneg %p141
        %p469 = pneg %p138
        %p470 = scmp.lt.s32.totalorder %s37, 1
        %s471 = scalar_select %p470, %s37, 1
        %p472 = scmp.lt.s32.totalorder %s38, 0
        %s473 = scalar_select %p472, %s38, 0
        %s474 = sadd.s32 %s473, %s471
        %s475 = scalar_lea.vmem %s4, %s474
        %p476 = pneg %p169
        %p477 = pneg %p166
        %p478 = scmp.lt.s32.totalorder %s37, 1
        %s479 = scalar_select %p478, %s37, 1
        %p480 = scmp.lt.s32.totalorder %s38, 0
        %s481 = scalar_select %p480, %s38, 0
        %s482 = smul.addr %s479, 4
        %s483 = sadd.s32 %s481, %s482
        %s484 = smul.addr %s483, 4
        %s485 = scalar_lea.vmem %s5, %s484
        %p486 = pneg %p197
        %p487 = pneg %p194
        %p488 = scmp.lt.s32.totalorder %s37, 1
        %s489 = scalar_select %p488, %s37, 1
        %p490 = scmp.lt.s32.totalorder %s38, 0
        %s491 = scalar_select %p490, %s38, 0
        %s492 = sadd.s32 %s491, %s489
        %s493 = scalar_lea.vmem %s6, %s492
        %p494 = pneg %p225
        %p495 = pneg %p222
        %s496 = smul.u32 8, %s38
        %p497 = scmp.lt.s32.totalorder %s37, 1
        %s498 = scalar_select %p497, %s37, 1
        %p499 = scmp.lt.s32.totalorder %s496, 7
        %s500 = scalar_select %p499, %s496, 7
        %s501 = smul.addr %s498, 8
        %s502 = sadd.s32 %s500, %s501
        %s503 = smul.addr %s502, 4
        %s504 = scalar_lea.vmem %s7, %s503
        %p505 = pneg %p253
        %p506 = pneg %p250
        %p507 = scmp.lt.s32.totalorder %s37, 1
        %s508 = scalar_select %p507, %s37, 1
        %s509 = scalar_lea.vmem %s8, %s508
        %p510 = pneg %p279
        %p511 = pneg %p276
        %p512 = pneg %p305
        %p513 = pneg %p302
        %s514 = sand.u32 %s292, 1
        %s515 = scalar_lea.sflag [#allocation7], %s514
        %s516 = sand.u32 %s292, 1
        %s517 = smul.addr %s516, 8
        %s518 = scalar_lea.vmem [#allocation8], %s517
        %p519 = pneg %p331
        %p520 = pneg %p328
        %s521 = sand.u32 %s318, 1
        %s522 = scalar_lea.sflag [#allocation10], %s521
        %s523 = sand.u32 %s318, 1
        %s524 = smul.addr %s523, 8
        %s525 = scalar_lea.vmem [#allocation9], %s524
        %p526 = scmp.lt.s32.totalorder %s37, 1
        %s527 = scalar_select %p526, %s37, 1
        %p528 = scmp.lt.s32.totalorder %s38, 0
        %s529 = scalar_select %p528, %s38, 0
        %s530 = smul.addr %s527, 4
        %s531 = sadd.s32 %s529, %s530
        %s532 = smul.addr %s531, 4
        %s533 = scalar_lea.vmem %s3, %s532
        %p534 = scmp.lt.s32.totalorder %s37, 1
        %s535 = scalar_select %p534, %s37, 1
        %p536 = scmp.lt.s32.totalorder %s38, 0
        %s537 = scalar_select %p536, %s38, 0
        %s538 = sadd.s32 %s537, %s535
        %s539 = scalar_lea.vmem %s4, %s538
        %p540 = scmp.lt.s32.totalorder %s37, 1
        %s541 = scalar_select %p540, %s37, 1
        %p542 = scmp.lt.s32.totalorder %s38, 0
        %s543 = scalar_select %p542, %s38, 0
        %s544 = smul.addr %s541, 4
        %s545 = sadd.s32 %s543, %s544
        %s546 = smul.addr %s545, 4
        %s547 = scalar_lea.vmem %s5, %s546
        %p548 = scmp.lt.s32.totalorder %s37, 1
        %s549 = scalar_select %p548, %s37, 1
        %p550 = scmp.lt.s32.totalorder %s38, 0
        %s551 = scalar_select %p550, %s38, 0
        %s552 = sadd.s32 %s551, %s549
        %s553 = scalar_lea.vmem %s6, %s552
        %s554 = smul.u32 8, %s38
        %p555 = scmp.lt.s32.totalorder %s37, 1
        %s556 = scalar_select %p555, %s37, 1
        %p557 = scmp.lt.s32.totalorder %s554, 7
        %s558 = scalar_select %p557, %s554, 7
        %s559 = smul.addr %s556, 8
        %s560 = sadd.s32 %s558, %s559
        %s561 = smul.addr %s560, 4
        %s562 = scalar_lea.vmem %s7, %s561
        %s563 = smul.u32 8, %s38
        %p564 = scmp.lt.s32.totalorder %s37, 1
        %s565 = scalar_select %p564, %s37, 1
        %s566 = scalar_lea.vmem %s8, %s565
        %p568 = scmp.eq.s32.totalorder %s37, 0
        %p569 = scmp.eq.s32.totalorder %s38, 0
        %p570 = pnand %p568, %p569
        %p571 = pneg %p570
        // Predicated region
        $region61: #{tpu_custom_call.1} parent=55 // pred_check
          _
        $region62: #{tpu_custom_call.1} parent=55 // pred_check_branch
          %573 = sbr.rel (%p570) target = $region64
        $region63: #{tpu_custom_call.1} parent=55 // pred_region
          %v574 = vld [vmem:[%s444] sm:$0xff]
          %v575 = vpack.c.bf16 %v574, %v574
          %vm576 = vcmask 257024
          %577 = vst.msk [vmem:[#allocation3] sm:$0xf] %vm576, %v575
          %vm578 = vcmask 261120
          %579 = vst.msk [vmem:[#allocation4] sm:$0xff] %vm578, 0.0
          %v580 = vld [vmem:[%s1] sm:$0xff]
          %v581 = vld [vmem:[%s1 + $0x8] sm:$0xff]
          %v582 = vld [vmem:[%s1 + $0x10] sm:$0xff]
          %v583 = vld [vmem:[%s1 + $0x18] sm:$0xff]
          %v584 = vld [vmem:[%s2] sm:$0x1]
          %v586 = vlaneseq
          %v587 = vshrl.u32 %v586, 7
          %v588 = vsub.s32 0, %v587
          %v589 = vrot.slane %v584, %v588
          %v592 = vsel %vm578, %v574, 0
          %594 = vmatprep.subr.mxu0 0.0
          %595 = vmatpush1.msra.mxu0 %v580
          %596 = vmatprep.subr.mxu0 0.0
          %597 = vmatpush1.msra.mxu0 %v581
          %598 = vmatprep.subr.mxu0 0.0
          %599 = vmatpush1.msra.mxu0 %v582
          %600 = vmatprep.subr.mxu0 0.0
          %601 = vmatpush1.msra.mxu0 %v583
          %602 = vmatprep.subr.mxu0 0.0
          %603 = vmatpush1.msra.mxu0 0.0
          %604 = vmatprep.subr.mxu0 0.0
          %605 = vmatpush1.msra.mxu0 0.0
          %606 = vmatprep.subr.mxu0 0.0
          %607 = vmatpush1.msra.mxu0 0.0
          %608 = vmatprep.subr.mxu0 0.0
          %609 = vmatpush1.msra.mxu0 0.0
          %610 = vmatprep.subr.mxu0 0.0
          %611 = vmatpush1.msra.mxu0 0.0
          %612 = vmatprep.subr.mxu0 0.0
          %613 = vmatpush1.msra.mxu0 0.0
          %614 = vmatprep.subr.mxu0 0.0
          %615 = vmatpush1.msra.mxu0 0.0
          %616 = vmatprep.subr.mxu0 0.0
          %617 = vmatpush1.msra.mxu0 0.0
          %618 = vmatprep.subr.mxu0 0.0
          %619 = vmatpush1.msra.mxu0 0.0
          %620 = vmatprep.subr.mxu0 0.0
          %621 = vmatpush1.msra.mxu0 0.0
          %622 = vmatprep.subr.mxu0 0.0
          %623 = vmatpush1.msra.mxu0 0.0
          %624 = vmatprep.subr.mxu0 0.0
          %625 = vmatpush1.msra.mxu0 0.0
          %626 = vmatprep.subr.mxu0 0.0
          %627 = vmatpush1.msra.mxu0 0.0
          %628 = vmatprep.subr.mxu0 0.0
          %629 = vmatpush1.msra.mxu0 0.0
          %630 = vmatprep.subr.mxu0 0.0
          %631 = vmatpush1.msra.mxu0 0.0
          %632 = vmatprep.subr.mxu0 0.0
          %633 = vmatpush1.msra.mxu0 0.0
          %634 = vmatprep.subr.mxu0 0.0
          %635 = vmatpush1.msra.mxu0 0.0
          %636 = vmatprep.subr.mxu0 0.0
          %637 = vmatpush1.msra.mxu0 0.0
          %638 = vmatprep.subr.mxu0 0.0
          %639 = vmatpush1.msra.mxu0 0.0
          %640 = vmatprep.subr.mxu0 0.0
          %641 = vmatpush1.msra.mxu0 0.0
          %642 = vmatprep.subr.mxu0 0.0
          %643 = vmatpush1.msra.mxu0 0.0
          %644 = vmatprep.subr.mxu0 0.0
          %645 = vmatpush1.msra.mxu0 0.0
          %646 = vmatprep.subr.mxu0 0.0
          %647 = vmatpush1.msra.mxu0 0.0
          %648 = vmatprep.subr.mxu0 0.0
          %649 = vmatpush1.msra.mxu0 0.0
          %650 = vmatprep.subr.mxu0 0.0
          %651 = vmatpush1.msra.mxu0 0.0
          %652 = vmatprep.subr.mxu0 0.0
          %653 = vmatpush1.msra.mxu0 0.0
          %654 = vmatprep.subr.mxu0 0.0
          %655 = vmatpush1.msra.mxu0 0.0
          %656 = vmatprep.subr.mxu0 0.0
          %657 = vmatpush1.msra.mxu0 0.0
          %658 = vmatprep.mubr.f32.mxu0 0.0
          %659 = vmatmul.mubr.f32.gmra.mrb[0].mxu0 %v592
          %v660 = vpop.f32.mrb[0].mxu0
          %v661 = vadd.f32 %v589, %v660
          %v662 = vpop.f32.mrb[0].mxu0
          %663 = vdwg.mxu0
          %664 = vmax.xlane.f32.xlu0 %v661
          %v665 = vpop.xlane.xlu0 %664
          %v666 = vsub.f32 %v661, %v665
          %v667 = vmul.f32 %v666, 1.442695
          %v668 = vpow.pop %v667
          %669 = vadd.xlane.f32.xlu0 %v668
          %v670 = vpop.xlane.xlu0 %669
          %v671 = vrcp.pop %v670
          %v672 = vmul.f32 %v668, %v671
          %v673 = vlaneseq
          %v674 = vand.u32 %v673, 127
          %675 = vmax.xlane.f32.xlu0 %v672
          %v676 = vpop.xlane.xlu0 %675
          %vm677 = vcmp.eq.f32.partialorder %v672, %v676
          %v678 = vsel %vm677, %v674, 128
          %v679 = vand.u32 %v678, 65535
          %v680 = vshra.s32 %v678, 16
          %v681 = vcvt.s32.f32 %v679
          %v682 = vcvt.s32.f32 %v680
          %683 = vmin.xlane.f32.xlu0 %v682
          %v684 = vpop.xlane.xlu0 %683
          %vm685 = vcmp.eq.f32.partialorder %v682, %v684
          %v686 = vsel %vm685, %v681, inf
          %687 = vmin.xlane.f32.xlu0 %v686
          %v688 = vpop.xlane.xlu0 %687
          %v689 = vcvt.f32.s32 %v688
          %v690 = vcvt.f32.s32 %v684
          %v691 = vshll.u32 %v690, 16
          %v692 = vadd.s32 %v691, %v689
          %vm693 = vcmp.eq.s32.totalorder %v674, %v692
          %v694 = vsel %vm693, -inf, %v672
          %695 = vmax.xlane.f32.xlu0 %v694
          %v696 = vpop.xlane.xlu0 %695
          %vm697 = vcmp.eq.f32.partialorder %v694, %v696
          %v698 = vsel %vm697, %v674, 128
          %v699 = vand.u32 %v698, 65535
          %v700 = vshra.s32 %v698, 16
          %v701 = vcvt.s32.f32 %v699
          %v702 = vcvt.s32.f32 %v700
          %703 = vmin.xlane.f32.xlu0 %v702
          %v704 = vpop.xlane.xlu0 %703
          %vm705 = vcmp.eq.f32.partialorder %v702, %v704
          %v706 = vsel %vm705, %v701, inf
          %707 = vmin.xlane.f32.xlu0 %v706
          %v708 = vpop.xlane.xlu0 %707
          %v709 = vcvt.f32.s32 %v708
          %v710 = vcvt.f32.s32 %v704
          %v711 = vshll.u32 %v710, 16
          %v712 = vadd.s32 %v711, %v709
          %vm713 = vcmp.eq.s32.totalorder %v674, %v712
          %vm714 = vmor %vm693, %vm713
          %v715 = vsel %vm714, 1, 0
          %v716 = vcvt.s32.f32 %v715
          %s717 = smul.u32 %s36, 8
          %v718 = vlaneseq
          %v719 = vshrl.u32 %v718, 7
          %v720 = vstv %s717
          %v721 = vadd.s32 %v720, %v719
          %vm722 = vcmp.lt.s32.totalorder %v721, 16
          %v723 = vsel %vm722, 1, 0
          %v724 = vcvt.s32.f32 %v723
          %v725 = vmul.f32 %v716, %v724
          %v726 = vmul.f32 %v672, %v725
          %727 = vadd.xlane.f32.xlu0 %v726
          %v728 = vpop.xlane.xlu0 %727
          %v729 = vmax.f32 %v728, 1e-30
          %v730 = vrcp.pop %v729
          %v731 = vmul.f32 %v726, %v730
          %vm732 = vcmp.eq.s32.totalorder %v674, 0
          %v733 = vsel %vm732, 1, 0
          %v734 = vcvt.s32.f32 %v733
          %v735 = vmul.f32 %v731, %v734
          %736 = vadd.xlane.f32.xlu0 %v735
          %v737 = vpop.xlane.xlu0 %736
          %vm738 = vcmask 7168
          %739 = vst.msk [vmem:[#allocation2] sm:$0xff] %vm738, %v737
          %vm740 = vcmp.eq.s32.totalorder %v674, 1
          %v741 = vsel %vm740, 1, 0
          %v742 = vcvt.s32.f32 %v741
          %v743 = vmul.f32 %v731, %v742
          %744 = vadd.xlane.f32.xlu0 %v743
          %v745 = vpop.xlane.xlu0 %744
          %s746 = scalar_lea.vmem [#allocation2], 8
          %747 = vst.msk [vmem:[%s746] sm:$0xff] %vm738, %v745
          %v748 = vrot.slane %v725, 4
          %v749 = vadd.f32 %v725, %v748
          %v750 = vrot.slane %v749, 2
          %v751 = vadd.f32 %v749, %v750
          %v752 = vrot.slane %v751, 1
          %v753 = vadd.f32 %v751, %v752
          %754 = vst [vmem:[%s525] sm:$0xff] %v753
        $region64: #{tpu_custom_call.1} parent=55 // pred_fallthru
          _
        %v755 = vld [vmem:[#allocation3] sm:$0xf]
        %v756 = vld [vmem:[%s533] sm:$0xf]
        %v757 = vld [vmem:[%s533 + $0x4] sm:$0xf]
        %v758 = vld [vmem:[%s533 + $0x8] sm:$0xf]
        %v759 = vld [vmem:[%s533 + $0xc] sm:$0xf]
        %v760 = vld [vmem:[%s539] sm:$0x1]
        %v762 = vlaneseq
        %v763 = vshrl.u32 %v762, 7
        %v764 = vsub.s32 0, %v763
        %v765 = vrot.slane %v760, %v764
        %v771 = vunpack.c.l.b16 %v756
        %v772 = vunpack.c.l.b16 %v757
        %v773 = vunpack.c.l.b16 %v758
        %v774 = vunpack.c.l.b16 %v759
        %v775 = vpack.c.b16 %v772, %v771
        %v776 = vpack.c.b16 %v774, %v773
        %vm779 = vcmask 261120
        %v781 = vsel %vm779, %v755, 0
        %783 = vmatprep.subr.bf16.mxu0 0
        %784 = vmatpush1.bf16.msra.mxu0 %v775
        %785 = vmatprep.subr.bf16.mxu0 0
        %786 = vmatpush1.bf16.msra.mxu0 %v776
        %787 = vmatprep.subr.bf16.mxu0 0
        %788 = vmatpush1.bf16.msra.mxu0 0
        %789 = vmatprep.subr.bf16.mxu0 0
        %790 = vmatpush1.bf16.msra.mxu0 0
        %791 = vmatprep.subr.bf16.mxu0 0
        %792 = vmatpush1.bf16.msra.mxu0 0
        %793 = vmatprep.subr.bf16.mxu0 0
        %794 = vmatpush1.bf16.msra.mxu0 0
        %795 = vmatprep.subr.bf16.mxu0 0
        %796 = vmatpush1.bf16.msra.mxu0 0
        %797 = vmatprep.subr.bf16.mxu0 0
        %798 = vmatpush1.bf16.msra.mxu0 0
        %799 = vmatprep.subr.bf16.mxu0 0
        %800 = vmatpush1.bf16.msra.mxu0 0
        %801 = vmatprep.subr.bf16.mxu0 0
        %802 = vmatpush1.bf16.msra.mxu0 0
        %803 = vmatprep.subr.bf16.mxu0 0
        %804 = vmatpush1.bf16.msra.mxu0 0
        %805 = vmatprep.subr.bf16.mxu0 0
        %806 = vmatpush1.bf16.msra.mxu0 0
        %807 = vmatprep.subr.bf16.mxu0 0
        %808 = vmatpush1.bf16.msra.mxu0 0
        %809 = vmatprep.subr.bf16.mxu0 0
        %810 = vmatpush1.bf16.msra.mxu0 0
        %811 = vmatprep.subr.bf16.mxu0 0
        %812 = vmatpush1.bf16.msra.mxu0 0
        %813 = vmatprep.subr.bf16.mxu0 0
        %814 = vmatpush1.bf16.msra.mxu0 0
        %815 = vmatprep.mubr.bf16.mxu0 0
        %816 = vmatmul.mubr.bf16.gmra.mrb[0].mxu0 %v781
        %v817 = vpop.f32.mrb[0].mxu0
        %v818 = vadd.f32 %v765, %v817
        %v819 = vpop.f32.mrb[0].mxu0
        %v820 = vpop.f32.mrb[0].mxu0
        %v821 = vpop.f32.mrb[0].mxu0
        %822 = vdwg.mxu0
        %v823 = vld [vmem:[%s547] sm:$0xf]
        %v824 = vld [vmem:[%s547 + $0x4] sm:$0xf]
        %v825 = vld [vmem:[%s547 + $0x8] sm:$0xf]
        %v826 = vld [vmem:[%s547 + $0xc] sm:$0xf]
        %v827 = vld [vmem:[%s553] sm:$0x1]
        %v829 = vlaneseq
        %v830 = vshrl.u32 %v829, 7
        %v831 = vsub.s32 0, %v830
        %v832 = vrot.slane %v827, %v831
        %v838 = vunpack.c.l.b16 %v823
        %v839 = vunpack.c.l.b16 %v824
        %v840 = vunpack.c.l.b16 %v825
        %v841 = vunpack.c.l.b16 %v826
        %v842 = vpack.c.b16 %v839, %v838
        %v843 = vpack.c.b16 %v841, %v840
        %846 = vmatprep.subr.bf16.mxu0 0
        %847 = vmatpush1.bf16.msra.mxu0 %v842
        %848 = vmatprep.subr.bf16.mxu0 0
        %849 = vmatpush1.bf16.msra.mxu0 %v843
        %850 = vmatprep.subr.bf16.mxu0 0
        %851 = vmatpush1.bf16.msra.mxu0 0
        %852 = vmatprep.subr.bf16.mxu0 0
        %853 = vmatpush1.bf16.msra.mxu0 0
        %854 = vmatprep.subr.bf16.mxu0 0
        %855 = vmatpush1.bf16.msra.mxu0 0
        %856 = vmatprep.subr.bf16.mxu0 0
        %857 = vmatpush1.bf16.msra.mxu0 0
        %858 = vmatprep.subr.bf16.mxu0 0
        %859 = vmatpush1.bf16.msra.mxu0 0
        %860 = vmatprep.subr.bf16.mxu0 0
        %861 = vmatpush1.bf16.msra.mxu0 0
        %862 = vmatprep.subr.bf16.mxu0 0
        %863 = vmatpush1.bf16.msra.mxu0 0
        %864 = vmatprep.subr.bf16.mxu0 0
        %865 = vmatpush1.bf16.msra.mxu0 0
        %866 = vmatprep.subr.bf16.mxu0 0
        %867 = vmatpush1.bf16.msra.mxu0 0
        %868 = vmatprep.subr.bf16.mxu0 0
        %869 = vmatpush1.bf16.msra.mxu0 0
        %870 = vmatprep.subr.bf16.mxu0 0
        %871 = vmatpush1.bf16.msra.mxu0 0
        %872 = vmatprep.subr.bf16.mxu0 0
        %873 = vmatpush1.bf16.msra.mxu0 0
        %874 = vmatprep.subr.bf16.mxu0 0
        %875 = vmatpush1.bf16.msra.mxu0 0
        %876 = vmatprep.subr.bf16.mxu0 0
        %877 = vmatpush1.bf16.msra.mxu0 0
        %878 = vmatprep.mubr.bf16.mxu0 0
        %879 = vmatmul.mubr.bf16.gmra.mrb[0].mxu0 %v781
        %v880 = vpop.f32.mrb[0].mxu0
        %v881 = vadd.f32 %v832, %v880
        %v882 = vpop.f32.mrb[0].mxu0
        %v883 = vpop.f32.mrb[0].mxu0
        %v884 = vpop.f32.mrb[0].mxu0
        %885 = vdwg.mxu0
        %v886 = vmul.f32 %v818, 0.5
        %v887 = vmul.f32 %v818, %v818
        %v888 = vmul.f32 %v887, %v818
        %v889 = vmul.f32 %v888, 0.044715
        %v890 = vadd.f32 %v818, %v889
        %v891 = vmul.f32 %v890, 0.7978846
        %v892 = vtanh.pop %v891
        %v893 = vadd.f32 %v892, 1.0
        %v894 = vmul.f32 %v886, %v893
        %v895 = vmul.f32 %v894, %v881
        %v896 = vpack.c.bf16 %v895, %v895
        %v897 = vld [vmem:[%s562] sm:$0xf]
        %v898 = vld [vmem:[%s562 + $0x4] sm:$0xf]
        %v899 = vld [vmem:[%s562 + $0x8] sm:$0xf]
        %v900 = vld [vmem:[%s562 + $0xc] sm:$0xf]
        %v901 = vld [vmem:[%s562 + $0x10] sm:$0xf]
        %v902 = vld [vmem:[%s562 + $0x14] sm:$0xf]
        %v903 = vld [vmem:[%s562 + $0x18] sm:$0xf]
        %v904 = vld [vmem:[%s562 + $0x1c] sm:$0xf]
        %v913 = vunpack.c.l.b16 %v897
        %v914 = vunpack.c.l.b16 %v898
        %v915 = vunpack.c.l.b16 %v899
        %v916 = vunpack.c.l.b16 %v900
        %v917 = vunpack.c.l.b16 %v901
        %v918 = vunpack.c.l.b16 %v902
        %v919 = vunpack.c.l.b16 %v903
        %v920 = vunpack.c.l.b16 %v904
        %v921 = vpack.c.b16 %v914, %v913
        %v922 = vpack.c.b16 %v916, %v915
        %v923 = vpack.c.b16 %v918, %v917
        %v924 = vpack.c.b16 %v920, %v919
        %vm929 = vcmask 523264
        %v931 = vsel %vm929, %v896, 0
        %933 = vmatprep.subr.bf16.mxu0 0
        %934 = vmatpush1.bf16.msra.mxu0 %v921
        %935 = vmatprep.subr.bf16.mxu0 0
        %936 = vmatpush1.bf16.msra.mxu0 %v922
        %937 = vmatprep.subr.bf16.mxu0 0
        %938 = vmatpush1.bf16.msra.mxu0 %v923
        %939 = vmatprep.subr.bf16.mxu0 0
        %940 = vmatpush1.bf16.msra.mxu0 %v924
        %941 = vmatprep.subr.bf16.mxu0 0
        %942 = vmatpush1.bf16.msra.mxu0 0
        %943 = vmatprep.subr.bf16.mxu0 0
        %944 = vmatpush1.bf16.msra.mxu0 0
        %945 = vmatprep.subr.bf16.mxu0 0
        %946 = vmatpush1.bf16.msra.mxu0 0
        %947 = vmatprep.subr.bf16.mxu0 0
        %948 = vmatpush1.bf16.msra.mxu0 0
        %949 = vmatprep.subr.bf16.mxu0 0
        %950 = vmatpush1.bf16.msra.mxu0 0
        %951 = vmatprep.subr.bf16.mxu0 0
        %952 = vmatpush1.bf16.msra.mxu0 0
        %953 = vmatprep.subr.bf16.mxu0 0
        %954 = vmatpush1.bf16.msra.mxu0 0
        %955 = vmatprep.subr.bf16.mxu0 0
        %956 = vmatpush1.bf16.msra.mxu0 0
        %957 = vmatprep.subr.bf16.mxu0 0
        %958 = vmatpush1.bf16.msra.mxu0 0
        %959 = vmatprep.subr.bf16.mxu0 0
        %960 = vmatpush1.bf16.msra.mxu0 0
        %961 = vmatprep.subr.bf16.mxu0 0
        %962 = vmatpush1.bf16.msra.mxu0 0
        %963 = vmatprep.subr.bf16.mxu0 0
        %964 = vmatpush1.bf16.msra.mxu0 0
        %965 = vmatprep.mubr.bf16.mxu0 0
        %966 = vmatmul.mubr.bf16.gmra.mrb[0].mxu0 %v931
        %v967 = vpop.f32.mrb[0].mxu0
        %v968 = vadd.f32 0.0, %v967
        %v969 = vpop.f32.mrb[0].mxu0
        %v970 = vpop.f32.mrb[0].mxu0
        %v971 = vpop.f32.mrb[0].mxu0
        %972 = vdwg.mxu0
        %s973 = smul.u32 %s37, 8
        %s974 = scalar_lea.vmem [#allocation2], %s973
        %v975 = vld [vmem:[%s974] sm:$0xff]
        %v976 = vld [vmem:[#allocation4] sm:$0xff]
        %978 = vset.pattern.permute.xlu0 0
        %979 = vperm.xlu0 %978, %v975
        %v980 = vpop.permute.xlu0 %979
        %v982 = vmul.f32 %v980, %v968
        %v983 = vadd.f32 %v976, %v982
        %984 = vst.msk [vmem:[#allocation4] sm:$0xff] %vm779, %v983
        // Predicated region
        $region65: #{tpu_custom_call.1} parent=55 // pred_check
          %p985 = pneg %p569
        $region66: #{tpu_custom_call.1} parent=55 // pred_check_branch
          %987 = sbr.rel (%p985) target = $region68
        $region67: #{tpu_custom_call.1} parent=55 // pred_region
          %v988 = vld [vmem:[#allocation4] sm:$0xff]
          %v989 = vld [vmem:[%s566] sm:$0x1]
          %v991 = vlaneseq
          %v992 = vshrl.u32 %v991, 7
          %v993 = vsub.s32 0, %v992
          %v994 = vrot.slane %v989, %v993
          %v996 = vmul.f32 %v980, %v994
          %v997 = vadd.f32 %v988, %v996
          %998 = vst.msk [vmem:[#allocation4] sm:$0xff] %vm779, %v997
        $region68: #{tpu_custom_call.1} parent=55 // pred_fallthru
          _
        %p999 = scmp.eq.s32.totalorder %s37, 1
        %p1000 = pnand %p999, %p569
        %p1001 = pneg %p1000
        // Predicated region
        $region69: #{tpu_custom_call.1} parent=55 // pred_check
          _
        $region70: #{tpu_custom_call.1} parent=55 // pred_check_branch
          %1003 = sbr.rel (%p1000) target = $region72
        $region71: #{tpu_custom_call.1} parent=55 // pred_region
          %v1004 = vld [vmem:[#allocation4] sm:$0xff]
          %1005 = vst.msk [vmem:[%s518] sm:$0xff] %vm779, %v1004
        $region72: #{tpu_custom_call.1} parent=55 // pred_fallthru
          _
        %s1006 = sand.u32 %s292, 1
        %s1007 = scalar_lea.sflag [#allocation7], %s1006
        %s1008 = sand.u32 %s292, 1
        %s1009 = smul.addr %s1008, 8
        %s1010 = scalar_lea.vmem [#allocation8], %s1009
        %s1011 = sand.u32 %s318, 1
        %s1012 = scalar_lea.sflag [#allocation10], %s1011
        %s1013 = sand.u32 %s318, 1
        %s1014 = smul.addr %s1013, 8
        %s1015 = scalar_lea.vmem [#allocation9], %s1014
        // Predicated region
        $region73: #{tpu_custom_call.1} parent=55 // pred_check
          %p1016 = pneg %p302
        $region74: #{tpu_custom_call.1} parent=55 // pred_check_branch
          %1018 = sbr.rel (%p1016) target = $region76
        $region75: #{tpu_custom_call.1} parent=55 // pred_region
          %s1020 = ssub.s32 128, 128
          %1021 = vsyncadd %s1007, %s1020
          %s1022 = smul.addr %s36, 128
          %s1023 = scalar_lea.hbm %s9, %s1022
          %s1025 = sshll.u32 %s1010, 4
          %s1026 = int_to_ptr.vmem [resolvable:$true] %s1025
          %1028 = dma.vmem_to_hbm [thread:$0]  %s1026, 128, %s1023, %s1007
        $region76: #{tpu_custom_call.1} parent=55 // pred_fallthru
          _
        // Predicated region
        $region77: #{tpu_custom_call.1} parent=55 // pred_check
          %p1029 = pneg %p328
        $region78: #{tpu_custom_call.1} parent=55 // pred_check_branch
          %1031 = sbr.rel (%p1029) target = $region80
        $region79: #{tpu_custom_call.1} parent=55 // pred_region
          %s1033 = ssub.s32 128, 128
          %1034 = vsyncadd %s1012, %s1033
          %s1035 = smul.addr %s36, 128
          %s1036 = scalar_lea.hbm %s10, %s1035
          %s1038 = sshll.u32 %s1015, 4
          %s1039 = int_to_ptr.vmem [resolvable:$true] %s1038
          %1041 = dma.vmem_to_hbm [thread:$0]  %s1039, 128, %s1036, %s1012
        $region80: #{tpu_custom_call.1} parent=55 // pred_fallthru
          _
      $region56: #{tpu_custom_call.1} parent=5 // pred_fallthru
        _
      %p1042 = scmp.le.s32.totalorder 2, %s26
      // Predicated region
      $region81: #{tpu_custom_call.1} parent=5 // pred_check
        %p1043 = pneg %p1042
      $region82: #{tpu_custom_call.1} parent=5 // pred_check_branch
        %1045 = sbr.rel (%p1043) target = $region84
      $region83: #{tpu_custom_call.1} parent=5 // pred_region
        %s1046 = ssub.s32 %s26, 2
        // Predicated region
        $region85: #{tpu_custom_call.1} parent=83 // pred_check
          %p1047 = pneg %p308
        $region86: #{tpu_custom_call.1} parent=83 // pred_check_branch
          %1049 = sbr.rel (%p1047) target = $region88
        $region87: #{tpu_custom_call.1} parent=83 // pred_region
          %s1050 = sand.u32 %s293, 1
          %s1051 = scalar_lea.sflag [#allocation7], %s1050
          %s1052 = sand.u32 %s293, 1
          %s1053 = smul.addr %s1052, 8
          %s1054 = scalar_lea.vmem [#allocation8], %s1053
          %1055 = dma.done %s1051, 128
        $region88: #{tpu_custom_call.1} parent=83 // pred_fallthru
          _
        // Predicated region
        $region89: #{tpu_custom_call.1} parent=83 // pred_check
          %p1056 = pneg %p334
        $region90: #{tpu_custom_call.1} parent=83 // pred_check_branch
          %1058 = sbr.rel (%p1056) target = $region92
        $region91: #{tpu_custom_call.1} parent=83 // pred_region
          %s1059 = sand.u32 %s319, 1
          %s1060 = scalar_lea.sflag [#allocation10], %s1059
          %s1061 = sand.u32 %s319, 1
          %s1062 = smul.addr %s1061, 8
          %s1063 = scalar_lea.vmem [#allocation9], %s1062
          %1064 = dma.done %s1060, 128
        $region92: #{tpu_custom_call.1} parent=83 // pred_fallthru
          _
      $region84: #{tpu_custom_call.1} parent=5 // pred_fallthru
        _
    $region6: #{tpu_custom_call.1} parent=1 // loop_footer
      %s30 = sadd.s32 1, %s26
    $region7: #{tpu_custom_call.1} parent=1 // loop_footer_branch
      %25 = sbr.rel target = $region3
    $region8: #{tpu_custom_call.1} parent=1 // loop_exit
      _
    %1065 = vsyncpa [#allocation6], 1
    %s1066 = scalar_lea.sflag [#allocation6], 1
    %1067 = vsyncpa %s1066, 1
    %1068 = vsyncpa [#allocation7], 1
    %s1069 = scalar_lea.sflag [#allocation7], 1
    %1070 = vsyncpa %s1069, 1
    %1071 = vsyncpa [#allocation10], 1
    %s1072 = scalar_lea.sflag [#allocation10], 1
    %1073 = vsyncpa %s1072, 1

</llo_original>
